<compile_context>
chip_gen: v7x
topology: tpu7x:2x2x1
jax: 0.10.0
libtpu: 0.0.40
codegen_flags: <defaults>
</compile_context>

<pallas_src>
import functools

import jax
import jax.numpy as jnp
from jax import lax
from jax.experimental import pallas as pl
from jax.experimental.pallas import tpu as pltpu


def _group_norm_kernel(x_ref, wb_ref, member_ref, member_t_ref, o_ref, *,
                       channels_per_group, fold_k, eps,
                       elementwise_in_input_dtype):
    f32 = jnp.float32
    tb, t_f, cf = x_ref.shape
    cg = channels_per_group
    c_loc = cf // fold_k            # distinct channels covered by this block
    g_loc = c_loc // cg             # groups covered by this block
    inv_n = 1.0 / float(t_f * fold_k * cg)   # elements per (batch, group)

    # Single fused pass: per-lane (folded channel) partial sums in f32.
    xf = x_ref[...].astype(f32)                       # (tb, t_f, cf)
    s1 = jnp.sum(xf, axis=1)                          # (tb, cf)
    s2 = jnp.sum(xf * xf, axis=1)                     # (tb, cf)

    # NOTE: E[x^2] - mean^2 is slightly less stable than a two-pass centered
    # variance, but all stats are accumulated in f32.
    if g_loc == 1:
        # The whole block is a single group: reduce across lanes, broadcast.
        s1g = jnp.sum(s1, axis=-1, keepdims=True)     # (tb, 1)
        s2g = jnp.sum(s2, axis=-1, keepdims=True)
        mean_c = s1g * inv_n
        var_c = jnp.maximum(s2g * inv_n - mean_c * mean_c, 0.0)
        inv_c = lax.rsqrt(var_c + eps)
    elif cg == 1 and fold_k == 1:
        # num_groups == channels (instance-norm style): per-lane stats directly.
        mean_c = s1 * inv_n
        var_c = jnp.maximum(s2 * inv_n - mean_c * mean_c, 0.0)
        inv_c = lax.rsqrt(var_c + eps)
    else:
        # General grouping (and/or folded lanes): fold per-lane partial sums
        # into per-group stats with a one-hot membership matmul (operands are
        # exact 0/1; HIGHEST precision keeps the f32 sums near-exact), then
        # scatter back the same way.
        member = member_ref[...]                      # (cf, g_loc) f32
        member_t = member_t_ref[...]                  # (g_loc, cf) f32
        hi = lax.Precision.HIGHEST
        s1g = jnp.dot(s1, member, precision=hi, preferred_element_type=f32)
        s2g = jnp.dot(s2, member, precision=hi, preferred_element_type=f32)
        mean_g = s1g * inv_n                          # (tb, g_loc)
        var_g = jnp.maximum(s2g * inv_n - mean_g * mean_g, 0.0)
        inv_g = lax.rsqrt(var_g + eps)
        mean_c = jnp.dot(mean_g, member_t, precision=hi, preferred_element_type=f32)
        inv_c = jnp.dot(inv_g, member_t, precision=hi, preferred_element_type=f32)

    wb = wb_ref[...].astype(f32)                      # (2, cf)
    scale = inv_c * wb[0:1, :]                        # (tb, cf)
    shift = wb[1:2, :] - mean_c * scale               # (tb, cf)

    # Re-read the input tile for the final mul-add so the f32 upcast above is
    # not kept live across the kernel (smaller VMEM footprint -> bigger tiles).
    if elementwise_in_input_dtype:
        dt = x_ref.dtype
        y = x_ref[...] * scale.astype(dt)[:, None, :] + shift.astype(dt)[:, None, :]
    else:
        y = x_ref[...].astype(f32) * scale[:, None, :] + shift[:, None, :]
    o_ref[...] = y.astype(o_ref.dtype)


def _device_kind():
    try:
        return jax.devices()[0].device_kind.lower()
    except Exception:
        return ""


def _vmem_capacity_bytes():
    try:
        cap = int(pltpu.get_tpu_info().vmem_capacity_bytes)
        if cap > 0:
            return cap
    except Exception:
        pass
    # Generation-aware fallback: v7x TensorCores have 64 MiB, earlier 128 MiB.
    return (64 << 20) if "7" in _device_kind() else (128 << 20)


def _has_bf16_valu():
    kind = _device_kind()
    if not kind:
        return False
    return not any(tag in kind for tag in ("v2", "v3", "v4", "v5"))


def _pick_fold(t, c):
    """Fold k time steps into the lane axis so the last dim becomes k*C (=128)."""
    if c >= 128 or 128 % c != 0:
        return 1
    k = 128 // c
    while k > 1 and t % k != 0:
        k //= 2
    return k


def _pick_channel_tile(cf, cg, t_f, live_per_elem, sizing_budget):
    """Group-aligned channel tiling for slabs too large for VMEM (no folding)."""
    if cf % 128 != 0 or cf <= 128:
        return cf
    if t_f * cf * live_per_elem <= sizing_budget:
        return cf
    valid = [d for d in range(128, cf, 128) if cf % d == 0 and d % cg == 0]
    if not valid:
        return cf
    fits = [d for d in valid if t_f * d * live_per_elem <= sizing_budget]
    return max(fits) if fits else min(valid)


def group_norm(x, weight=None, bias=None, *, num_groups, eps=1e-5,
               tile_batch=None, channel_tile=None):
    """GroupNorm matching the PyTorch module's forward.

    x: (batch, time, channels) or (batch, time1, time2, channels)
    weight/bias: per-channel affine of shape (channels,), or None (identity).
    """
    orig_shape = x.shape
    if x.ndim == 3:
        x3 = x
    elif x.ndim == 4:
        b0, d1, d2, ch = x.shape
        x3 = x.reshape(b0, d1 * d2, ch)
    else:
        raise ValueError("expected a 3D or 4D input, got shape %s" % (orig_shape,))

    batch, t, c = x3.shape
    num_groups = int(num_groups)
    if c % num_groups != 0:
        raise ValueError("channels (%d) must be divisible by num_groups (%d)"
                         % (c, num_groups))
    cg = c // num_groups

    if weight is None:
        weight = jnp.ones((c,), dtype=jnp.float32)
    if bias is None:
        bias = jnp.zeros((c,), dtype=jnp.float32)
    wb = jnp.stack([jnp.asarray(weight), jnp.asarray(bias)]).astype(jnp.float32)  # (2, c)

    # --- Lane-dense folding: (B, T, C) -> (B, T/k, k*C) fills all 128 lanes.
    fold_k = _pick_fold(t, c)
    # TODO(synk): when C < 128 does not divide 128 (or T has no useful divisor),
    # the output stays lane-sparse (masked stores); a pad+mask variant would fix it.
    t_f, cf = t // fold_k, c * fold_k
    if fold_k > 1:
        x3 = x3.reshape(batch, t_f, cf)
        wb = jnp.tile(wb, (1, fold_k))                                       # (2, cf)

    itemsize = jnp.dtype(x.dtype).itemsize
    cap = _vmem_capacity_bytes()
    sizing_budget = int(cap * 0.55)
    vmem_limit = min(int(cap * 0.85), 100 << 20)
    live_per_elem = 4 * itemsize + 4   # 2x in + 2x out (double-buffered) + 1 f32 working copy

    # --- Group-aligned channel tiling (only when not lane-folding).
    if channel_tile is not None and fold_k == 1:
        c_tile = int(channel_tile)
        if cf % c_tile != 0 or c_tile % cg != 0 or (c_tile != cf and c_tile % 128 != 0):
            raise ValueError("invalid channel_tile=%d for C=%d, cg=%d" % (c_tile, cf, cg))
    elif fold_k == 1:
        c_tile = _pick_channel_tile(cf, cg, t_f, live_per_elem, sizing_budget)
    else:
        c_tile = cf
    grid_c = cf // c_tile
    # TODO(synk): a single (T, c_tile=128*lcm) slab larger than the VMEM budget
    # would need a two-pass / accumulator variant over time tiles.

    # --- One-hot group membership over the (folded) channel block, built once
    # here (hoisted out of the kernel body).  Group-aligned channel chunks all
    # share the same local membership, so a constant index map suffices.
    c_loc = c_tile // fold_k
    g_loc = c_loc // cg
    use_member = not (g_loc == 1 or (cg == 1 and fold_k == 1))
    if use_member:
        grp_ids = (jnp.arange(c_tile, dtype=jnp.int32) % c_loc) // cg
        member = (grp_ids[:, None] == jnp.arange(g_loc, dtype=jnp.int32)[None, :]
                  ).astype(jnp.float32)                                      # (c_tile, g_loc)
        member_t = member.T                                                  # (g_loc, c_tile)
    else:
        member = jnp.zeros((1, 1), dtype=jnp.float32)                        # unused by kernel
        member_t = jnp.zeros((1, 1), dtype=jnp.float32)
    member_bytes = int(member.size + member_t.size) * 4 * 2                  # ~double-buffered

    # --- Batch tiling: ~8 MiB of input per step, capped by the VMEM budget;
    # >= 2 grid steps when batch >= 2 (pipeline overlap + v7x megacore).
    if tile_batch is not None:
        tile_b = int(min(max(1, tile_batch), batch))
    else:
        budget_b = max(sizing_budget - member_bytes, 1 << 20)
        per_item_in = max(1, t_f * c_tile * itemsize)
        per_item_live = max(1, t_f * c_tile * live_per_elem)
        tile_b = int(max(1, min((8 << 20) // per_item_in,
                                budget_b // per_item_live, batch)))
        if batch >= 2 and grid_c == 1:
            tile_b = min(tile_b, -(-batch // 2))
    grid_b = pl.cdiv(batch, tile_b)
    batch_pad = grid_b * tile_b
    if batch_pad != batch:
        x3 = jnp.pad(x3, ((0, batch_pad - batch), (0, 0), (0, 0)))

    elementwise_in_input_dtype = bool(x.dtype == jnp.bfloat16 and _has_bf16_valu())

    kernel = functools.partial(
        _group_norm_kernel,
        channels_per_group=int(cg), fold_k=int(fold_k), eps=float(eps),
        elementwise_in_input_dtype=elementwise_in_input_dtype)

    out = pl.pallas_call(
        kernel,
        out_shape=jax.ShapeDtypeStruct((batch_pad, t_f, cf), x.dtype),
        grid_spec=pltpu.PrefetchScalarGridSpec(
            num_scalar_prefetch=0,
            grid=(grid_b, grid_c),
            in_specs=[
                pl.BlockSpec((tile_b, t_f, c_tile), lambda i, j: (i, 0, j)),
                pl.BlockSpec((2, c_tile), lambda i, j: (0, j)),
                pl.BlockSpec(member.shape, lambda i, j: (0, 0)),
                pl.BlockSpec(member_t.shape, lambda i, j: (0, 0)),
            ],
            out_specs=pl.BlockSpec((tile_b, t_f, c_tile), lambda i, j: (i, 0, j)),
        ),
        compiler_params=pltpu.CompilerParams(
            dimension_semantics=("parallel", "parallel"),
            vmem_limit_bytes=int(vmem_limit),
        ),
    )(x3, wb, member, member_t)

    if batch_pad != batch:
        out = out[:batch]
    return out.reshape(orig_shape)


if __name__ == "__main__":
    def ref_group_norm(x, w, b, g, eps=1e-5):
        shp = x.shape
        c = shp[-1]
        x3 = x.reshape(shp[0], -1, c).astype(jnp.float32)
        bsz, t, _ = x3.shape
        xg = x3.reshape(bsz, t, g, c // g)
        mean = jnp.mean(xg, axis=(1, 3), keepdims=True)
        var = jnp.mean((xg - mean) ** 2, axis=(1, 3), keepdims=True)
        y = (xg - mean) / jnp.sqrt(var + eps)
        y = y.reshape(bsz, t, c) * w.astype(jnp.float32) + b.astype(jnp.float32)
        return y.reshape(shp).astype(x.dtype)

    key = jax.random.PRNGKey(0)

    # 1) 3D (batch, time, channels), general grouping, lane-folded (C=32 -> 128).
    k1, k2, k3, key = jax.random.split(key, 4)
    x = jax.random.normal(k1, (2, 8, 32), dtype=jnp.float32)
    w = 1.0 + 0.1 * jax.random.normal(k2, (32,), dtype=jnp.float32)
    b = 0.1 * jax.random.normal(k3, (32,), dtype=jnp.float32)
    y = group_norm(x, w, b, num_groups=4)
    jax.block_until_ready(y)
    ref = ref_group_norm(x, w, b, 4)
    assert y.shape == x.shape and y.dtype == x.dtype
    assert jnp.allclose(y, ref, atol=1e-4, rtol=1e-4), "3D num_groups=4 mismatch"

    # 2) num_groups == channels (docstring configuration), padded-tail batch path.
    k1, k2, k3, key = jax.random.split(key, 4)
    x = jax.random.normal(k1, (3, 7, 128), dtype=jnp.float32)
    w = 1.0 + 0.1 * jax.random.normal(k2, (128,), dtype=jnp.float32)
    b = 0.1 * jax.random.normal(k3, (128,), dtype=jnp.float32)
    y = group_norm(x, w, b, num_groups=128, tile_batch=2)
    jax.block_until_ready(y)
    ref = ref_group_norm(x, w, b, 128)
    assert jnp.allclose(y, ref, atol=1e-4, rtol=1e-4), "num_groups=C mismatch"

    # 3) 4D input (batch, time1, time2, channels), single group, lane-folded.
    k1, k2, k3, key = jax.random.split(key, 4)
    x = jax.random.normal(k1, (2, 4, 6, 16), dtype=jnp.float32)
    w = 1.0 + 0.1 * jax.random.normal(k2, (16,), dtype=jnp.float32)
    b = 0.1 * jax.random.normal(k3, (16,), dtype=jnp.float32)
    y = group_norm(x, w, b, num_groups=1)
    jax.block_until_ready(y)
    ref = ref_group_norm(x, w, b, 1)
    assert y.shape == x.shape
    assert jnp.allclose(y, ref, atol=1e-4, rtol=1e-4), "4D num_groups=1 mismatch"

    # 4) Group-aligned channel tiling (C=256 split into 128-wide chunks).
    k1, k2, k3, key = jax.random.split(key, 4)
    x = jax.random.normal(k1, (2, 16, 256), dtype=jnp.float32)
    w = 1.0 + 0.1 * jax.random.normal(k2, (256,), dtype=jnp.float32)
    b = 0.1 * jax.random.normal(k3, (256,), dtype=jnp.float32)
    y = group_norm(x, w, b, num_groups=8, channel_tile=128)
    jax.block_until_ready(y)
    ref = ref_group_norm(x, w, b, 8)
    assert jnp.allclose(y, ref, atol=1e-4, rtol=1e-4), "channel-tiled mismatch"

    # 5) bf16 input (bf16 elementwise fast path on v6e/v7x, f32 path on v5e).
    k1, k2, k3, key = jax.random.split(key, 4)
    x = jax.random.normal(k1, (2, 12, 64), dtype=jnp.bfloat16)
    w = 1.0 + 0.1 * jax.random.normal(k2, (64,), dtype=jnp.float32)
    b = 0.1 * jax.random.normal(k3, (64,), dtype=jnp.float32)
    y = group_norm(x, w, b, num_groups=4)
    jax.block_until_ready(y)
    ref = ref_group_norm(x, w, b, 4)
    assert y.dtype == jnp.bfloat16
    assert jnp.allclose(y.astype(jnp.float32), ref.astype(jnp.float32),
                        atol=1e-1, rtol=1e-1), "bf16 mismatch"

    print("KERNEL_OK")
</pallas_src>

<mosaic_0001>
module attributes {stable_mosaic.version = 11 : i64} {
  func.func @_group_norm_kernel(%arg0: i32, %arg1: i32, %arg2: memref<1x2x128xf32, #tpu.memory_space<vmem>>, %arg3: memref<2x128xf32, #tpu.memory_space<vmem>>, %arg4: memref<128x4xf32, #tpu.memory_space<vmem>>, %arg5: memref<4x128xf32, #tpu.memory_space<vmem>>, %arg6: memref<1x2x128xf32, #tpu.memory_space<vmem>>) attributes {dimension_semantics = [#tpu.dimension_semantics<parallel>, #tpu.dimension_semantics<parallel>], iteration_bounds = array<i64: 2, 1>, scalar_prefetch = 0 : i64, scratch_operands = 0 : i64, tpu.core_type = #tpu.core_type<tc>, window_params = [{transform_indices = @transform_0, window_bounds = array<i64: 1, 2, 128>}, {transform_indices = @transform_1, window_bounds = array<i64: 2, 128>}, {pipeline_mode = #tpu.pipeline_mode<synchronous>, transform_indices = @transform_2, window_bounds = array<i64: 128, 4>}, {pipeline_mode = #tpu.pipeline_mode<synchronous>, transform_indices = @transform_3, window_bounds = array<i64: 4, 128>}, {transform_indices = @transform_4, window_bounds = array<i64: 1, 2, 128>}]} {
    %c0 = arith.constant 0 : index
    %c0_0 = arith.constant 0 : index
    %c0_1 = arith.constant 0 : index
    %0 = vector.load %arg2[%c0, %c0_0, %c0_1] : memref<1x2x128xf32, #tpu.memory_space<vmem>>, vector<1x2x128xf32>
    %cst = arith.constant dense<0.000000e+00> : vector<1x128xf32>
    %1 = vector.multi_reduction <add>, %0, %cst [1] : vector<1x2x128xf32> to vector<1x128xf32>
    %2 = arith.mulf %0, %0 : vector<1x2x128xf32>
    %cst_2 = arith.constant dense<0.000000e+00> : vector<1x128xf32>
    %3 = vector.multi_reduction <add>, %2, %cst_2 [1] : vector<1x2x128xf32> to vector<1x128xf32>
    %c0_3 = arith.constant 0 : index
    %c0_4 = arith.constant 0 : index
    %4 = vector.load %arg4[%c0_3, %c0_4] : memref<128x4xf32, #tpu.memory_space<vmem>>, vector<128x4xf32>
    %c0_5 = arith.constant 0 : index
    %c0_6 = arith.constant 0 : index
    %5 = vector.load %arg5[%c0_5, %c0_6] : memref<4x128xf32, #tpu.memory_space<vmem>>, vector<4x128xf32>
    %cst_7 = arith.constant dense<0.000000e+00> : vector<1x4xf32>
    %6 = tpu.matmul %1, %4, %cst_7 {dimension_numbers = #tpu.dot_dimension_numbers<[1], [0], [0], [1], [0, 0, 1, 1], [], []>, precision = #tpu.contract_precision<fp32>} : vector<1x128xf32>, vector<128x4xf32>, vector<1x4xf32> -> vector<1x4xf32>
    %cst_8 = arith.constant dense<0.000000e+00> : vector<1x4xf32>
    %7 = tpu.matmul %3, %4, %cst_8 {dimension_numbers = #tpu.dot_dimension_numbers<[1], [0], [0], [1], [0, 0, 1, 1], [], []>, precision = #tpu.contract_precision<fp32>} : vector<1x128xf32>, vector<128x4xf32>, vector<1x4xf32> -> vector<1x4xf32>
    %cst_9 = arith.constant 1.562500e-02 : f32
    %8 = vector.broadcast %cst_9 : f32 to vector<1x4xf32>
    %9 = arith.mulf %6, %8 : vector<1x4xf32>
    %cst_10 = arith.constant 1.562500e-02 : f32
    %10 = vector.broadcast %cst_10 : f32 to vector<1x4xf32>
    %11 = arith.mulf %7, %10 : vector<1x4xf32>
    %12 = arith.mulf %9, %9 : vector<1x4xf32>
    %13 = arith.subf %11, %12 : vector<1x4xf32>
    %cst_11 = arith.constant 0.000000e+00 : f32
    %14 = vector.broadcast %cst_11 : f32 to vector<1x4xf32>
    %15 = arith.maximumf %13, %14 : vector<1x4xf32>
    %cst_12 = arith.constant 9.99999974E-6 : f32
    %16 = vector.broadcast %cst_12 : f32 to vector<1x4xf32>
    %17 = arith.addf %15, %16 : vector<1x4xf32>
    %18 = math.rsqrt %17 : vector<1x4xf32>
    %cst_13 = arith.constant dense<0.000000e+00> : vector<1x128xf32>
    %19 = tpu.matmul %9, %5, %cst_13 {dimension_numbers = #tpu.dot_dimension_numbers<[1], [0], [0], [1], [0, 0, 1, 1], [], []>, precision = #tpu.contract_precision<fp32>} : vector<1x4xf32>, vector<4x128xf32>, vector<1x128xf32> -> vector<1x128xf32>
    %cst_14 = arith.constant dense<0.000000e+00> : vector<1x128xf32>
    %20 = tpu.matmul %18, %5, %cst_14 {dimension_numbers = #tpu.dot_dimension_numbers<[1], [0], [0], [1], [0, 0, 1, 1], [], []>, precision = #tpu.contract_precision<fp32>} : vector<1x4xf32>, vector<4x128xf32>, vector<1x128xf32> -> vector<1x128xf32>
    %c0_15 = arith.constant 0 : index
    %c0_16 = arith.constant 0 : index
    %21 = vector.load %arg3[%c0_15, %c0_16] : memref<2x128xf32, #tpu.memory_space<vmem>>, vector<2x128xf32>
    %22 = vector.extract_strided_slice %21 {offsets = [0, 0], sizes = [1, 128], strides = [1, 1]} : vector<2x128xf32> to vector<1x128xf32>
    %23 = arith.mulf %20, %22 : vector<1x128xf32>
    %24 = vector.extract_strided_slice %21 {offsets = [1, 0], sizes = [1, 128], strides = [1, 1]} : vector<2x128xf32> to vector<1x128xf32>
    %25 = arith.mulf %19, %23 : vector<1x128xf32>
    %26 = arith.subf %24, %25 : vector<1x128xf32>
    %c0_17 = arith.constant 0 : index
    %c0_18 = arith.constant 0 : index
    %c0_19 = arith.constant 0 : index
    %27 = vector.load %arg2[%c0_17, %c0_18, %c0_19] : memref<1x2x128xf32, #tpu.memory_space<vmem>>, vector<1x2x128xf32>
    %28 = vector.shape_cast %23 : vector<1x128xf32> to vector<1x1x128xf32>
    %29 = vector.broadcast %28 : vector<1x1x128xf32> to vector<1x2x128xf32>
    %30 = arith.mulf %27, %29 : vector<1x2x128xf32>
    %31 = vector.shape_cast %26 : vector<1x128xf32> to vector<1x1x128xf32>
    %32 = vector.broadcast %31 : vector<1x1x128xf32> to vector<1x2x128xf32>
    %33 = arith.addf %30, %32 : vector<1x2x128xf32>
    %c0_20 = arith.constant 0 : index
    %c0_21 = arith.constant 0 : index
    %c0_22 = arith.constant 0 : index
    %34 = vector.load %arg6[%c0_20, %c0_21, %c0_22] : memref<1x2x128xf32, #tpu.memory_space<vmem>>, vector<1x2x128xf32>
    tpu.vector_store %arg6[%c0_20, %c0_21, %c0_22], %33 {strides = array<i32>} : memref<1x2x128xf32, #tpu.memory_space<vmem>>, vector<1x2x128xf32>,
    return
  }
  func.func @transform_0(%arg0: i32, %arg1: i32) -> (i32, i32, i32) {
    %c0_i32 = arith.constant 0 : i32
    %c0_i32_0 = arith.constant 0 : i32
    return %arg0, %c0_i32, %arg1 : i32, i32, i32
  }
  func.func @transform_1(%arg0: i32, %arg1: i32) -> (i32, i32) {
    %c0_i32 = arith.constant 0 : i32
    %c0_i32_0 = arith.constant 0 : i32
    return %c0_i32, %arg1 : i32, i32
  }
  func.func @transform_2(%arg0: i32, %arg1: i32) -> (i32, i32) {
    %c0_i32 = arith.constant 0 : i32
    %c0_i32_0 = arith.constant 0 : i32
    %c0_i32_1 = arith.constant 0 : i32
    return %c0_i32, %c0_i32_0 : i32, i32
  }
  func.func @transform_3(%arg0: i32, %arg1: i32) -> (i32, i32) {
    %c0_i32 = arith.constant 0 : i32
    %c0_i32_0 = arith.constant 0 : i32
    %c0_i32_1 = arith.constant 0 : i32
    return %c0_i32, %c0_i32_0 : i32, i32
  }
  func.func @transform_4(%arg0: i32, %arg1: i32) -> (i32, i32, i32) {
    %c0_i32 = arith.constant 0 : i32
    %c0_i32_0 = arith.constant 0 : i32
    return %arg0, %c0_i32, %arg1 : i32, i32, i32
  }
}

</mosaic_0001>

<llo_original>
// kernel: tpu_custom_call.1
$region0: #{tpu_custom_call.1}
  #allocation0 [shape = 'u32[]', space=smem, size = 0x4, offset = 0x4, fixed_abs, tag = 'smem constant byte address 0x4 - core index']
  #allocation1 [shape = 'u32[144,128]{1,0:T(1,128)}', space=vmem, size = 0x12000, scoped, tag = 'internal scratch']
  %s0 = inlined_call_operand.hbm [shape: f32[2,2,128], index: 0, kind: input, shape index: {}]
  %s1 = inlined_call_operand.hbm [shape: f32[2,128], index: 1, kind: input, shape index: {}]
  %s2 = inlined_call_operand.hbm [shape: f32[128,4], index: 2, kind: input, shape index: {}]
  %s3 = inlined_call_operand.hbm [shape: f32[4,128], index: 3, kind: input, shape index: {}]
  %s4 = inlined_call_operand.hbm [shape: f32[2,2,128], index: 4, kind: output, shape index: {}]
  %s5 = sld [smem:[#allocation0]]
  $region65: #{tpu_custom_call.1} parent=0
    _
  %s7 = ssub.s32 1, %s5
  %s8 = scalar_select 0, %s7, %s5
  $region1: #{tpu_custom_call.1} parent=0
    #allocation2 [shape = 'u8[2048]{0}', space=vmem, size = 0x800, scoped, tag = 'input window, operand 0']
    #allocation3 [shape = 's32[2]{0}', space=sflag, size = 0x8, scoped, tag = 'scoped memory for tpu_custom_call.1']
    #allocation4 [shape = 's32[2]{0}', space=sflag, size = 0x8, scoped, tag = 'scoped memory for tpu_custom_call.1']
    #allocation5 [shape = 'u8[1024]{0}', space=vmem, size = 0x400, scoped, tag = 'input window, operand 1, single buffered']
    #allocation6 [shape = 's32[1]{0}', space=sflag, size = 0x4, scoped, tag = 'scoped memory for tpu_custom_call.1']
    #allocation7 [shape = 'u8[65536]{0}', space=vmem, size = 0x10000, scoped, tag = 'input window, operand 2, single buffered']
    #allocation8 [shape = 'u8[2048]{0}', space=vmem, size = 0x800, scoped, tag = 'input window, operand 3, single buffered']
    #allocation9 [shape = 's32[1]{0}', space=sflag, size = 0x4, scoped, tag = 'scoped memory for tpu_custom_call.1']
    #allocation10 [shape = 'u8[2048]{0}', space=vmem, size = 0x800, scoped, tag = 'output window, operand 0']
    %9 = vsyncpa [#allocation3], 0
    %s10 = scalar_lea.sflag [#allocation3], 1
    %11 = vsyncpa %s10, 0
    %12 = vsyncpa [#allocation6], 0
    %13 = vsyncpa [#allocation9], 0
    %14 = vsyncpa [#allocation4], 0
    %s15 = scalar_lea.sflag [#allocation4], 1
    %16 = vsyncpa %s15, 0
    loop: start=0, step=1, limit=4
    $region2: #{tpu_custom_call.1} parent=1 // loop_pre_header
      _
    $region3: #{tpu_custom_call.1} parent=1 // loop_header
      %s18 = sphi 0, %s22
      %p19 = scmp.ge.s32.totalorder %s18, 4
      %s25 = sphi 0, %s37
      %s26 = sphi 0, %s33
      %s27 = sphi 0, %s25
      %s28 = sphi 0, %s26
      %s29 = sphi 0, %s27
      %s30 = sphi 0, %s28
      %s42 = sphi 0, %s44
      %s45 = sphi 0, %s42
      %s46 = sphi 0, %s45
      %s62 = sphi 0, %s46
      %s68 = sphi 0, %s70
      %s71 = sphi 0, %s68
      %s72 = sphi 0, %s71
      %s88 = sphi 0, %s72
      %s92 = sphi 0, %s92
      %s94 = sphi 0, %s92
      %s95 = sphi 0, %s94
      %s109 = sphi 0, %s95
      %s113 = sphi 0, %s113
      %s115 = sphi 0, %s113
      %s116 = sphi 0, %s115
      %s130 = sphi 0, %s116
      %s138 = sphi 0, %s140
      %s141 = sphi 0, %s138
      %s142 = sphi 0, %s141
      %s158 = sphi 0, %s142
    $region4: #{tpu_custom_call.1} parent=1 // loop_header_branch
      %21 = sbr.rel (%p19) target = $region8
    $region5: #{tpu_custom_call.1} parent=1 // loop_body
      %s23 = ssub.s32 %s18, 1
      %s24 = ssub.s32 %s18, 2
      %s31 = sadd.s32 1, %s26
      %p32 = scmp.ge.s32.totalorder %s31, 1
      %s33 = scalar_select %p32, 0, %s31
      %s34 = sadd.s32 1, %s25
      %s35 = scalar_select %p32, %s34, %s25
      %p36 = scmp.ge.s32.totalorder %s35, 2
      %s37 = scalar_select %p36, 0, %s35
      %s38 = ssub.s32 %s25, %s37
      %s39 = ssub.s32 %s26, %s33
      %s40 = sor.u32 %s38, %s39
      %p41 = scmp.eq.s32.totalorder %s40, 0
      %s43 = sadd.s32 %s42, 1
      %s44 = scalar_select %p41, %s42, %s43
      %p47 = pneg %p41
      %p48 = scmp.eq.s32.totalorder %s18, 1
      %p49 = por %p47, %p48
      %p50 = scmp.ne.s32.totalorder %s42, %s45
      %p51 = scmp.eq.s32.totalorder %s18, 0
      %p52 = por %p50, %p51
      %p53 = scmp.ne.s32.totalorder %s42, %s45
      %p54 = scmp.eq.s32.totalorder %s23, 1
      %p55 = por %p53, %p54
      %p56 = scmp.ne.s32.totalorder %s45, %s46
      %p57 = scmp.eq.s32.totalorder %s23, 0
      %p58 = por %p56, %p57
      %p59 = scmp.ne.s32.totalorder %s45, %s46
      %p60 = scmp.eq.s32.totalorder %s24, 1
      %p61 = por %p59, %p60
      %p63 = scmp.ne.s32.totalorder %s46, %s62
      %p64 = scmp.eq.s32.totalorder %s24, 0
      %p65 = por %p63, %p64
      %s66 = ssub.s32 %s26, %s33
      %p67 = scmp.eq.s32.totalorder %s66, 0
      %s69 = sadd.s32 %s68, 1
      %s70 = scalar_select %p67, %s68, %s69
      %p73 = pneg %p67
      %p74 = scmp.eq.s32.totalorder %s18, 1
      %p75 = por %p73, %p74
      %p76 = scmp.ne.s32.totalorder %s68, %s71
      %p77 = scmp.eq.s32.totalorder %s18, 0
      %p78 = por %p76, %p77
      %p79 = scmp.ne.s32.totalorder %s68, %s71
      %p80 = scmp.eq.s32.totalorder %s23, 1
      %p81 = por %p79, %p80
      %p82 = scmp.ne.s32.totalorder %s71, %s72
      %p83 = scmp.eq.s32.totalorder %s23, 0
      %p84 = por %p82, %p83
      %p85 = scmp.ne.s32.totalorder %s71, %s72
      %p86 = scmp.eq.s32.totalorder %s24, 1
      %p87 = por %p85, %p86
      %p89 = scmp.ne.s32.totalorder %s72, %s88
      %p90 = scmp.eq.s32.totalorder %s24, 0
      %p91 = por %p89, %p90
      %s93 = sadd.s32 %s92, 1
      %p96 = scmp.eq.s32.totalorder %s18, 1
      %p97 = scmp.ne.s32.totalorder %s92, %s94
      %p98 = scmp.eq.s32.totalorder %s18, 0
      %p99 = por %p97, %p98
      %p100 = scmp.ne.s32.totalorder %s92, %s94
      %p101 = scmp.eq.s32.totalorder %s23, 1
      %p102 = por %p100, %p101
      %p103 = scmp.ne.s32.totalorder %s94, %s95
      %p104 = scmp.eq.s32.totalorder %s23, 0
      %p105 = por %p103, %p104
      %p106 = scmp.ne.s32.totalorder %s94, %s95
      %p107 = scmp.eq.s32.totalorder %s24, 1
      %p108 = por %p106, %p107
      %p110 = scmp.ne.s32.totalorder %s95, %s109
      %p111 = scmp.eq.s32.totalorder %s24, 0
      %p112 = por %p110, %p111
      %s114 = sadd.s32 %s113, 1
      %p117 = scmp.eq.s32.totalorder %s18, 1
      %p118 = scmp.ne.s32.totalorder %s113, %s115
      %p119 = scmp.eq.s32.totalorder %s18, 0
      %p120 = por %p118, %p119
      %p121 = scmp.ne.s32.totalorder %s113, %s115
      %p122 = scmp.eq.s32.totalorder %s23, 1
      %p123 = por %p121, %p122
      %p124 = scmp.ne.s32.totalorder %s115, %s116
      %p125 = scmp.eq.s32.totalorder %s23, 0
      %p126 = por %p124, %p125
      %p127 = scmp.ne.s32.totalorder %s115, %s116
      %p128 = scmp.eq.s32.totalorder %s24, 1
      %p129 = por %p127, %p128
      %p131 = scmp.ne.s32.totalorder %s116, %s130
      %p132 = scmp.eq.s32.totalorder %s24, 0
      %p133 = por %p131, %p132
      %s134 = ssub.s32 %s25, %s37
      %s135 = ssub.s32 %s26, %s33
      %s136 = sor.u32 %s134, %s135
      %p137 = scmp.eq.s32.totalorder %s136, 0
      %s139 = sadd.s32 %s138, 1
      %s140 = scalar_select %p137, %s138, %s139
      %p143 = pneg %p137
      %p144 = scmp.eq.s32.totalorder %s18, 1
      %p145 = por %p143, %p144
      %p146 = scmp.ne.s32.totalorder %s138, %s141
      %p147 = scmp.eq.s32.totalorder %s18, 0
      %p148 = por %p146, %p147
      %p149 = scmp.ne.s32.totalorder %s138, %s141
      %p150 = scmp.eq.s32.totalorder %s23, 1
      %p151 = por %p149, %p150
      %p152 = scmp.ne.s32.totalorder %s141, %s142
      %p153 = scmp.eq.s32.totalorder %s23, 0
      %p154 = por %p152, %p153
      %p155 = scmp.ne.s32.totalorder %s141, %s142
      %p156 = scmp.eq.s32.totalorder %s24, 1
      %p157 = por %p155, %p156
      %p159 = scmp.ne.s32.totalorder %s142, %s158
      %p160 = scmp.eq.s32.totalorder %s24, 0
      %p161 = por %p159, %p160
      %p162 = scmp.le.s32.totalorder 1, %s18
      %p163 = scmp.lt.s32.totalorder %s18, 3
      %p164 = pnand %p162, %p163
      %p165 = pneg %p164
      // Predicated region
      $region9: #{tpu_custom_call.1} parent=5 // pred_check
        _
      $region10: #{tpu_custom_call.1} parent=5 // pred_check_branch
        %167 = sbr.rel (%p164) target = $region12
      $region11: #{tpu_custom_call.1} parent=5 // pred_region
        %s168 = ssub.s32 %s18, 1
        // Predicated region
        $region13: #{tpu_custom_call.1} parent=11 // pred_check
          %p169 = pneg %p84
        $region14: #{tpu_custom_call.1} parent=11 // pred_check_branch
          %171 = sbr.rel (%p169) target = $region16
        $region15: #{tpu_custom_call.1} parent=11 // pred_region
          %s173 = ssub.s32 32, 32
          %174 = vsyncadd [#allocation6], %s173
          %s175 = smul.addr %s28, 32
          %s176 = scalar_lea.hbm %s1, %s175
          %s178 = sshll.u32 [#allocation5], 4
          %s179 = int_to_ptr.vmem [resolvable:$true] %s178
          %181 = dma.hbm_to_vmem [thread:$0]  %s176, 32, %s179, [#allocation6]
        $region16: #{tpu_custom_call.1} parent=11 // pred_fallthru
          _
        // Predicated region
        $region17: #{tpu_custom_call.1} parent=11 // pred_check
          %p182 = pneg %p105
        $region18: #{tpu_custom_call.1} parent=11 // pred_check_branch
          %184 = sbr.rel (%p182) target = $region20
        $region19: #{tpu_custom_call.1} parent=11 // pred_region
          %s186 = ssub.s32 2048, 2048
          %187 = vsyncadd [#allocation6], %s186
          %s188 = sshll.u32 [#allocation7], 4
          %s189 = int_to_ptr.vmem [resolvable:$true] %s188
          %194 = dma.hbm_to_vmem [thread:$0]  %s2, 2048, %s189, [#allocation6], 128, 128, 8
        $region20: #{tpu_custom_call.1} parent=11 // pred_fallthru
          _
        // Predicated region
        $region21: #{tpu_custom_call.1} parent=11 // pred_check
          %p195 = pneg %p126
        $region22: #{tpu_custom_call.1} parent=11 // pred_check_branch
          %197 = sbr.rel (%p195) target = $region24
        $region23: #{tpu_custom_call.1} parent=11 // pred_region
          %s199 = ssub.s32 64, 64
          %200 = vsyncadd [#allocation9], %s199
          %s202 = sshll.u32 [#allocation8], 4
          %s203 = int_to_ptr.vmem [resolvable:$true] %s202
          %205 = dma.hbm_to_vmem [thread:$0]  %s3, 64, %s203, [#allocation9]
        $region24: #{tpu_custom_call.1} parent=11 // pred_fallthru
          _
      $region12: #{tpu_custom_call.1} parent=5 // pred_fallthru
        _
      %p206 = scmp.lt.s32.totalorder %s18, 2
      // Predicated region
      $region25: #{tpu_custom_call.1} parent=5 // pred_check
        %p207 = pneg %p206
      $region26: #{tpu_custom_call.1} parent=5 // pred_check_branch
        %209 = sbr.rel (%p207) target = $region28
      $region27: #{tpu_custom_call.1} parent=5 // pred_region
        // Predicated region
        $region29: #{tpu_custom_call.1} parent=27 // pred_check
          %p210 = pneg %p52
        $region30: #{tpu_custom_call.1} parent=27 // pred_check_branch
          %212 = sbr.rel (%p210) target = $region32
        $region31: #{tpu_custom_call.1} parent=27 // pred_region
          %s213 = sand.u32 %s42, 1
          %s214 = scalar_lea.sflag [#allocation3], %s213
          %s215 = sand.u32 %s42, 1
          %s216 = smul.addr %s215, 2
          %s217 = scalar_lea.vmem [#allocation2], %s216
          %s219 = ssub.s32 32, 32
          %220 = vsyncadd %s214, %s219
          %s221 = sadd.s32 %s26, %s25
          %s222 = smul.addr %s221, 32
          %s223 = scalar_lea.hbm %s0, %s222
          %s225 = sshll.u32 %s217, 4
          %s226 = int_to_ptr.vmem [resolvable:$true] %s225
          %228 = dma.hbm_to_vmem [thread:$0]  %s223, 32, %s226, %s214
        $region32: #{tpu_custom_call.1} parent=27 // pred_fallthru
          _
      $region28: #{tpu_custom_call.1} parent=5 // pred_fallthru
        _
      %p229 = scmp.le.s32.totalorder 1, %s18
      %p230 = scmp.lt.s32.totalorder %s18, 3
      %p231 = pnand %p229, %p230
      %p232 = pneg %p231
      // Predicated region
      $region33: #{tpu_custom_call.1} parent=5 // pred_check
        _
      $region34: #{tpu_custom_call.1} parent=5 // pred_check_branch
        %234 = sbr.rel (%p231) target = $region36
      $region35: #{tpu_custom_call.1} parent=5 // pred_region
        %s235 = ssub.s32 %s18, 1
        %s236 = sand.u32 %s45, 1
        %s237 = scalar_lea.sflag [#allocation3], %s236
        %s238 = sand.u32 %s45, 1
        %s239 = smul.addr %s238, 2
        %s240 = scalar_lea.vmem [#allocation2], %s239
        // Predicated region
        $region37: #{tpu_custom_call.1} parent=35 // pred_check
          %p241 = pneg %p58
        $region38: #{tpu_custom_call.1} parent=35 // pred_check_branch
          %243 = sbr.rel (%p241) target = $region40
        $region39: #{tpu_custom_call.1} parent=35 // pred_region
          %244 = dma.done %s237, 32
        $region40: #{tpu_custom_call.1} parent=35 // pred_fallthru
          _
        // Predicated region
        $region41: #{tpu_custom_call.1} parent=35 // pred_check
          %p245 = pneg %p84
        $region42: #{tpu_custom_call.1} parent=35 // pred_check_branch
          %247 = sbr.rel (%p245) target = $region44
        $region43: #{tpu_custom_call.1} parent=35 // pred_region
          %248 = dma.done [#allocation6], 32
        $region44: #{tpu_custom_call.1} parent=35 // pred_fallthru
          _
        // Predicated region
        $region45: #{tpu_custom_call.1} parent=35 // pred_check
          %p249 = pneg %p105
        $region46: #{tpu_custom_call.1} parent=35 // pred_check_branch
          %251 = sbr.rel (%p249) target = $region48
        $region47: #{tpu_custom_call.1} parent=35 // pred_region
          %252 = dma.done [#allocation6], 2048
        $region48: #{tpu_custom_call.1} parent=35 // pred_fallthru
          _
        // Predicated region
        $region49: #{tpu_custom_call.1} parent=35 // pred_check
          %p253 = pneg %p126
        $region50: #{tpu_custom_call.1} parent=35 // pred_check_branch
          %255 = sbr.rel (%p253) target = $region52
        $region51: #{tpu_custom_call.1} parent=35 // pred_region
          %256 = dma.done [#allocation9], 64
        $region52: #{tpu_custom_call.1} parent=35 // pred_fallthru
          _
        %s257 = sand.u32 %s45, 1
        %s258 = scalar_lea.sflag [#allocation3], %s257
        %s259 = sand.u32 %s45, 1
        %s260 = smul.addr %s259, 2
        %s261 = scalar_lea.vmem [#allocation2], %s260
        %p262 = pneg %p58
        %p263 = pneg %p55
        %p264 = pneg %p84
        %p265 = pneg %p81
        %p266 = pneg %p105
        %p267 = pneg %p102
        %p268 = pneg %p126
        %p269 = pneg %p123
        %p270 = pneg %p154
        %p271 = pneg %p151
        %s272 = sand.u32 %s141, 1
        %s273 = scalar_lea.sflag [#allocation4], %s272
        %s274 = sand.u32 %s141, 1
        %s275 = smul.addr %s274, 2
        %s276 = scalar_lea.vmem [#allocation10], %s275
        %v277 = vld [vmem:[%s240] sm:$0x3]
        %vm278 = vcmask 1041408
        %v279 = vsel %vm278, %v277, 0.0
        %v280 = vrot.slane %v279, 4
        %v281 = vadd.f32 %v279, %v280
        %v282 = vrot.slane %v281, 2
        %v283 = vadd.f32 %v281, %v282
        %v284 = vrot.slane %v283, 1
        %v285 = vadd.f32 %v283, %v284
        %v286 = vmul.f32 %v277, %v277
        %v287 = vsel %vm278, %v286, 0.0
        %v288 = vrot.slane %v287, 4
        %v289 = vadd.f32 %v287, %v288
        %v290 = vrot.slane %v289, 2
        %v291 = vadd.f32 %v289, %v290
        %v292 = vrot.slane %v291, 1
        %v293 = vadd.f32 %v291, %v292
        %v294 = vld [vmem:[#allocation7] sm:$0xff]
        %v295 = vld [vmem:[#allocation7 + $0x8] sm:$0xff]
        %v296 = vld [vmem:[#allocation7 + $0x10] sm:$0xff]
        %v297 = vld [vmem:[#allocation7 + $0x18] sm:$0xff]
        %v298 = vld [vmem:[#allocation7 + $0x20] sm:$0xff]
        %v299 = vld [vmem:[#allocation7 + $0x28] sm:$0xff]
        %v300 = vld [vmem:[#allocation7 + $0x30] sm:$0xff]
        %v301 = vld [vmem:[#allocation7 + $0x38] sm:$0xff]
        %v302 = vld [vmem:[#allocation7 + $0x40] sm:$0xff]
        %v303 = vld [vmem:[#allocation7 + $0x48] sm:$0xff]
        %v304 = vld [vmem:[#allocation7 + $0x50] sm:$0xff]
        %v305 = vld [vmem:[#allocation7 + $0x58] sm:$0xff]
        %v306 = vld [vmem:[#allocation7 + $0x60] sm:$0xff]
        %v307 = vld [vmem:[#allocation7 + $0x68] sm:$0xff]
        %v308 = vld [vmem:[#allocation7 + $0x70] sm:$0xff]
        %v309 = vld [vmem:[#allocation7 + $0x78] sm:$0xff]
        %v310 = vld [vmem:[#allocation8] sm:$0xf]
        %311 = vmatprep.subr.mxu0 0.0
        %v312 = vand.u32 %v294, 4294901760
        %313 = vmatpush1.msra.mxu0 %v312
        %314 = vmatprep.subr.mxu0 0.0
        %v315 = vand.u32 %v295, 4294901760
        %316 = vmatpush1.msra.mxu0 %v315
        %317 = vmatprep.subr.mxu0 0.0
        %v318 = vand.u32 %v296, 4294901760
        %319 = vmatpush1.msra.mxu0 %v318
        %320 = vmatprep.subr.mxu0 0.0
        %v321 = vand.u32 %v297, 4294901760
        %322 = vmatpush1.msra.mxu0 %v321
        %323 = vmatprep.subr.mxu0 0.0
        %v324 = vand.u32 %v298, 4294901760
        %325 = vmatpush1.msra.mxu0 %v324
        %326 = vmatprep.subr.mxu0 0.0
        %v327 = vand.u32 %v299, 4294901760
        %328 = vmatpush1.msra.mxu0 %v327
        %329 = vmatprep.subr.mxu0 0.0
        %v330 = vand.u32 %v300, 4294901760
        %331 = vmatpush1.msra.mxu0 %v330
        %332 = vmatprep.subr.mxu0 0.0
        %v333 = vand.u32 %v301, 4294901760
        %334 = vmatpush1.msra.mxu0 %v333
        %335 = vmatprep.subr.mxu0 0.0
        %v336 = vand.u32 %v302, 4294901760
        %337 = vmatpush1.msra.mxu0 %v336
        %338 = vmatprep.subr.mxu0 0.0
        %v339 = vand.u32 %v303, 4294901760
        %340 = vmatpush1.msra.mxu0 %v339
        %341 = vmatprep.subr.mxu0 0.0
        %v342 = vand.u32 %v304, 4294901760
        %343 = vmatpush1.msra.mxu0 %v342
        %344 = vmatprep.subr.mxu0 0.0
        %v345 = vand.u32 %v305, 4294901760
        %346 = vmatpush1.msra.mxu0 %v345
        %347 = vmatprep.subr.mxu0 0.0
        %v348 = vand.u32 %v306, 4294901760
        %349 = vmatpush1.msra.mxu0 %v348
        %350 = vmatprep.subr.mxu0 0.0
        %v351 = vand.u32 %v307, 4294901760
        %352 = vmatpush1.msra.mxu0 %v351
        %353 = vmatprep.subr.mxu0 0.0
        %v354 = vand.u32 %v308, 4294901760
        %355 = vmatpush1.msra.mxu0 %v354
        %356 = vmatprep.subr.mxu0 0.0
        %v357 = vand.u32 %v309, 4294901760
        %358 = vmatpush1.msra.mxu0 %v357
        %359 = vmatprep.subr.mxu0 0.0
        %360 = vmatpush1.msra.mxu0 0.0
        %361 = vmatprep.subr.mxu0 0.0
        %362 = vmatpush1.msra.mxu0 0.0
        %363 = vmatprep.subr.mxu0 0.0
        %364 = vmatpush1.msra.mxu0 0.0
        %365 = vmatprep.subr.mxu0 0.0
        %366 = vmatpush1.msra.mxu0 0.0
        %367 = vmatprep.subr.mxu0 0.0
        %368 = vmatpush1.msra.mxu0 0.0
        %369 = vmatprep.subr.mxu0 0.0
        %370 = vmatpush1.msra.mxu0 0.0
        %371 = vmatprep.subr.mxu0 0.0
        %372 = vmatpush1.msra.mxu0 0.0
        %373 = vmatprep.subr.mxu0 0.0
        %374 = vmatpush1.msra.mxu0 0.0
        %375 = vmatprep.subr.mxu0 0.0
        %376 = vmatpush1.msra.mxu0 0.0
        %377 = vmatprep.subr.mxu0 0.0
        %378 = vmatpush1.msra.mxu0 0.0
        %379 = vmatprep.subr.mxu0 0.0
        %380 = vmatpush1.msra.mxu0 0.0
        %381 = vmatprep.subr.mxu0 0.0
        %382 = vmatpush1.msra.mxu0 0.0
        %383 = vmatprep.subr.mxu0 0.0
        %384 = vmatpush1.msra.mxu0 0.0
        %385 = vmatprep.subr.mxu0 0.0
        %386 = vmatpush1.msra.mxu0 0.0
        %387 = vmatprep.subr.mxu0 0.0
        %388 = vmatpush1.msra.mxu0 0.0
        %389 = vmatprep.subr.mxu0 0.0
        %390 = vmatpush1.msra.mxu0 0.0
        %391 = vmatprep.mubr.f32.mxu0 0.0
        %v392 = vand.u32 %v285, 4294901760
        %v393 = vsub.f32 %v285, %v392
        %v394 = vand.u32 %v393, 4294901760
        %v395 = vsub.f32 %v393, %v394
        %v396 = vand.u32 %v395, 4294901760
        %397 = vmatmul.mubr.f32.gmra.mrb[0].mxu0 %v396
        %v398 = vpop.f32.mrb[0].mxu0
        %v399 = vadd.f32 0.0, %v398
        %v400 = vpop.f32.mrb[0].mxu0
        %401 = vdwg.mxu0
        %402 = vmatprep.subr.mxu0 0.0
        %v403 = vand.u32 %v294, 4294901760
        %v404 = vsub.f32 %v294, %v403
        %v405 = vand.u32 %v404, 4294901760
        %v406 = vsub.f32 %v404, %v405
        %v407 = vand.u32 %v406, 4294901760
        %408 = vmatpush1.msra.mxu0 %v407
        %409 = vmatprep.subr.mxu0 0.0
        %v410 = vand.u32 %v295, 4294901760
        %v411 = vsub.f32 %v295, %v410
        %v412 = vand.u32 %v411, 4294901760
        %v413 = vsub.f32 %v411, %v412
        %v414 = vand.u32 %v413, 4294901760
        %415 = vmatpush1.msra.mxu0 %v414
        %416 = vmatprep.subr.mxu0 0.0
        %v417 = vand.u32 %v296, 4294901760
        %v418 = vsub.f32 %v296, %v417
        %v419 = vand.u32 %v418, 4294901760
        %v420 = vsub.f32 %v418, %v419
        %v421 = vand.u32 %v420, 4294901760
        %422 = vmatpush1.msra.mxu0 %v421
        %423 = vmatprep.subr.mxu0 0.0
        %v424 = vand.u32 %v297, 4294901760
        %v425 = vsub.f32 %v297, %v424
        %v426 = vand.u32 %v425, 4294901760
        %v427 = vsub.f32 %v425, %v426
        %v428 = vand.u32 %v427, 4294901760
        %429 = vmatpush1.msra.mxu0 %v428
        %430 = vmatprep.subr.mxu0 0.0
        %v431 = vand.u32 %v298, 4294901760
        %v432 = vsub.f32 %v298, %v431
        %v433 = vand.u32 %v432, 4294901760
        %v434 = vsub.f32 %v432, %v433
        %v435 = vand.u32 %v434, 4294901760
        %436 = vmatpush1.msra.mxu0 %v435
        %437 = vmatprep.subr.mxu0 0.0
        %v438 = vand.u32 %v299, 4294901760
        %v439 = vsub.f32 %v299, %v438
        %v440 = vand.u32 %v439, 4294901760
        %v441 = vsub.f32 %v439, %v440
        %v442 = vand.u32 %v441, 4294901760
        %443 = vmatpush1.msra.mxu0 %v442
        %444 = vmatprep.subr.mxu0 0.0
        %v445 = vand.u32 %v300, 4294901760
        %v446 = vsub.f32 %v300, %v445
        %v447 = vand.u32 %v446, 4294901760
        %v448 = vsub.f32 %v446, %v447
        %v449 = vand.u32 %v448, 4294901760
        %450 = vmatpush1.msra.mxu0 %v449
        %451 = vmatprep.subr.mxu0 0.0
        %v452 = vand.u32 %v301, 4294901760
        %v453 = vsub.f32 %v301, %v452
        %v454 = vand.u32 %v453, 4294901760
        %v455 = vsub.f32 %v453, %v454
        %v456 = vand.u32 %v455, 4294901760
        %457 = vmatpush1.msra.mxu0 %v456
        %458 = vmatprep.subr.mxu0 0.0
        %v459 = vand.u32 %v302, 4294901760
        %v460 = vsub.f32 %v302, %v459
        %v461 = vand.u32 %v460, 4294901760
        %v462 = vsub.f32 %v460, %v461
        %v463 = vand.u32 %v462, 4294901760
        %464 = vmatpush1.msra.mxu0 %v463
        %465 = vmatprep.subr.mxu0 0.0
        %v466 = vand.u32 %v303, 4294901760
        %v467 = vsub.f32 %v303, %v466
        %v468 = vand.u32 %v467, 4294901760
        %v469 = vsub.f32 %v467, %v468
        %v470 = vand.u32 %v469, 4294901760
        %471 = vmatpush1.msra.mxu0 %v470
        %472 = vmatprep.subr.mxu0 0.0
        %v473 = vand.u32 %v304, 4294901760
        %v474 = vsub.f32 %v304, %v473
        %v475 = vand.u32 %v474, 4294901760
        %v476 = vsub.f32 %v474, %v475
        %v477 = vand.u32 %v476, 4294901760
        %478 = vmatpush1.msra.mxu0 %v477
        %479 = vmatprep.subr.mxu0 0.0
        %v480 = vand.u32 %v305, 4294901760
        %v481 = vsub.f32 %v305, %v480
        %v482 = vand.u32 %v481, 4294901760
        %v483 = vsub.f32 %v481, %v482
        %v484 = vand.u32 %v483, 4294901760
        %485 = vmatpush1.msra.mxu0 %v484
        %486 = vmatprep.subr.mxu0 0.0
        %v487 = vand.u32 %v306, 4294901760
        %v488 = vsub.f32 %v306, %v487
        %v489 = vand.u32 %v488, 4294901760
        %v490 = vsub.f32 %v488, %v489
        %v491 = vand.u32 %v490, 4294901760
        %492 = vmatpush1.msra.mxu0 %v491
        %493 = vmatprep.subr.mxu0 0.0
        %v494 = vand.u32 %v307, 4294901760
        %v495 = vsub.f32 %v307, %v494
        %v496 = vand.u32 %v495, 4294901760
        %v497 = vsub.f32 %v495, %v496
        %v498 = vand.u32 %v497, 4294901760
        %499 = vmatpush1.msra.mxu0 %v498
        %500 = vmatprep.subr.mxu0 0.0
        %v501 = vand.u32 %v308, 4294901760
        %v502 = vsub.f32 %v308, %v501
        %v503 = vand.u32 %v502, 4294901760
        %v504 = vsub.f32 %v502, %v503
        %v505 = vand.u32 %v504, 4294901760
        %506 = vmatpush1.msra.mxu0 %v505
        %507 = vmatprep.subr.mxu0 0.0
        %v508 = vand.u32 %v309, 4294901760
        %v509 = vsub.f32 %v309, %v508
        %v510 = vand.u32 %v509, 4294901760
        %v511 = vsub.f32 %v509, %v510
        %v512 = vand.u32 %v511, 4294901760
        %513 = vmatpush1.msra.mxu0 %v512
        %514 = vmatprep.subr.mxu0 0.0
        %515 = vmatpush1.msra.mxu0 0.0
        %516 = vmatprep.subr.mxu0 0.0
        %517 = vmatpush1.msra.mxu0 0.0
        %518 = vmatprep.subr.mxu0 0.0
        %519 = vmatpush1.msra.mxu0 0.0
        %520 = vmatprep.subr.mxu0 0.0
        %521 = vmatpush1.msra.mxu0 0.0
        %522 = vmatprep.subr.mxu0 0.0
        %523 = vmatpush1.msra.mxu0 0.0
        %524 = vmatprep.subr.mxu0 0.0
        %525 = vmatpush1.msra.mxu0 0.0
        %526 = vmatprep.subr.mxu0 0.0
        %527 = vmatpush1.msra.mxu0 0.0
        %528 = vmatprep.subr.mxu0 0.0
        %529 = vmatpush1.msra.mxu0 0.0
        %530 = vmatprep.subr.mxu0 0.0
        %531 = vmatpush1.msra.mxu0 0.0
        %532 = vmatprep.subr.mxu0 0.0
        %533 = vmatpush1.msra.mxu0 0.0
        %534 = vmatprep.subr.mxu0 0.0
        %535 = vmatpush1.msra.mxu0 0.0
        %536 = vmatprep.subr.mxu0 0.0
        %537 = vmatpush1.msra.mxu0 0.0
        %538 = vmatprep.subr.mxu0 0.0
        %539 = vmatpush1.msra.mxu0 0.0
        %540 = vmatprep.subr.mxu0 0.0
        %541 = vmatpush1.msra.mxu0 0.0
        %542 = vmatprep.subr.mxu0 0.0
        %543 = vmatpush1.msra.mxu0 0.0
        %544 = vmatprep.subr.mxu0 0.0
        %545 = vmatpush1.msra.mxu0 0.0
        %546 = vmatprep.mubr.f32.mxu0 0.0
        %v547 = vand.u32 %v285, 4294901760
        %548 = vmatmul.mubr.f32.gmra.mrb[0].mxu0 %v547
        %v549 = vpop.f32.mrb[0].mxu0
        %v550 = vadd.f32 %v399, %v549
        %v551 = vpop.f32.mrb[0].mxu0
        %552 = vdwg.mxu0
        %553 = vmatprep.subr.mxu0 0.0
        %v554 = vand.u32 %v294, 4294901760
        %v555 = vsub.f32 %v294, %v554
        %556 = vmatpush1.msra.mxu0 %v555
        %557 = vmatprep.subr.mxu0 0.0
        %v558 = vand.u32 %v295, 4294901760
        %v559 = vsub.f32 %v295, %v558
        %560 = vmatpush1.msra.mxu0 %v559
        %561 = vmatprep.subr.mxu0 0.0
        %v562 = vand.u32 %v296, 4294901760
        %v563 = vsub.f32 %v296, %v562
        %564 = vmatpush1.msra.mxu0 %v563
        %565 = vmatprep.subr.mxu0 0.0
        %v566 = vand.u32 %v297, 4294901760
        %v567 = vsub.f32 %v297, %v566
        %568 = vmatpush1.msra.mxu0 %v567
        %569 = vmatprep.subr.mxu0 0.0
        %v570 = vand.u32 %v298, 4294901760
        %v571 = vsub.f32 %v298, %v570
        %572 = vmatpush1.msra.mxu0 %v571
        %573 = vmatprep.subr.mxu0 0.0
        %v574 = vand.u32 %v299, 4294901760
        %v575 = vsub.f32 %v299, %v574
        %576 = vmatpush1.msra.mxu0 %v575
        %577 = vmatprep.subr.mxu0 0.0
        %v578 = vand.u32 %v300, 4294901760
        %v579 = vsub.f32 %v300, %v578
        %580 = vmatpush1.msra.mxu0 %v579
        %581 = vmatprep.subr.mxu0 0.0
        %v582 = vand.u32 %v301, 4294901760
        %v583 = vsub.f32 %v301, %v582
        %584 = vmatpush1.msra.mxu0 %v583
        %585 = vmatprep.subr.mxu0 0.0
        %v586 = vand.u32 %v302, 4294901760
        %v587 = vsub.f32 %v302, %v586
        %588 = vmatpush1.msra.mxu0 %v587
        %589 = vmatprep.subr.mxu0 0.0
        %v590 = vand.u32 %v303, 4294901760
        %v591 = vsub.f32 %v303, %v590
        %592 = vmatpush1.msra.mxu0 %v591
        %593 = vmatprep.subr.mxu0 0.0
        %v594 = vand.u32 %v304, 4294901760
        %v595 = vsub.f32 %v304, %v594
        %596 = vmatpush1.msra.mxu0 %v595
        %597 = vmatprep.subr.mxu0 0.0
        %v598 = vand.u32 %v305, 4294901760
        %v599 = vsub.f32 %v305, %v598
        %600 = vmatpush1.msra.mxu0 %v599
        %601 = vmatprep.subr.mxu0 0.0
        %v602 = vand.u32 %v306, 4294901760
        %v603 = vsub.f32 %v306, %v602
        %604 = vmatpush1.msra.mxu0 %v603
        %605 = vmatprep.subr.mxu0 0.0
        %v606 = vand.u32 %v307, 4294901760
        %v607 = vsub.f32 %v307, %v606
        %608 = vmatpush1.msra.mxu0 %v607
        %609 = vmatprep.subr.mxu0 0.0
        %v610 = vand.u32 %v308, 4294901760
        %v611 = vsub.f32 %v308, %v610
        %612 = vmatpush1.msra.mxu0 %v611
        %613 = vmatprep.subr.mxu0 0.0
        %v614 = vand.u32 %v309, 4294901760
        %v615 = vsub.f32 %v309, %v614
        %616 = vmatpush1.msra.mxu0 %v615
        %617 = vmatprep.subr.mxu0 0.0
        %618 = vmatpush1.msra.mxu0 0.0
        %619 = vmatprep.subr.mxu0 0.0
        %620 = vmatpush1.msra.mxu0 0.0
        %621 = vmatprep.subr.mxu0 0.0
        %622 = vmatpush1.msra.mxu0 0.0
        %623 = vmatprep.subr.mxu0 0.0
        %624 = vmatpush1.msra.mxu0 0.0
        %625 = vmatprep.subr.mxu0 0.0
        %626 = vmatpush1.msra.mxu0 0.0
        %627 = vmatprep.subr.mxu0 0.0
        %628 = vmatpush1.msra.mxu0 0.0
        %629 = vmatprep.subr.mxu0 0.0
        %630 = vmatpush1.msra.mxu0 0.0
        %631 = vmatprep.subr.mxu0 0.0
        %632 = vmatpush1.msra.mxu0 0.0
        %633 = vmatprep.subr.mxu0 0.0
        %634 = vmatpush1.msra.mxu0 0.0
        %635 = vmatprep.subr.mxu0 0.0
        %636 = vmatpush1.msra.mxu0 0.0
        %637 = vmatprep.subr.mxu0 0.0
        %638 = vmatpush1.msra.mxu0 0.0
        %639 = vmatprep.subr.mxu0 0.0
        %640 = vmatpush1.msra.mxu0 0.0
        %641 = vmatprep.subr.mxu0 0.0
        %642 = vmatpush1.msra.mxu0 0.0
        %643 = vmatprep.subr.mxu0 0.0
        %644 = vmatpush1.msra.mxu0 0.0
        %645 = vmatprep.subr.mxu0 0.0
        %646 = vmatpush1.msra.mxu0 0.0
        %647 = vmatprep.subr.mxu0 0.0
        %648 = vmatpush1.msra.mxu0 0.0
        %649 = vmatprep.mubr.f32.mxu0 0.0
        %v650 = vand.u32 %v285, 4294901760
        %v651 = vsub.f32 %v285, %v650
        %652 = vmatmul.mubr.f32.gmra.mrb[0].mxu0 %v651
        %v653 = vpop.f32.mrb[0].mxu0
        %v654 = vadd.f32 %v550, %v653
        %v655 = vpop.f32.mrb[0].mxu0
        %656 = vdwg.mxu0
        %657 = vmatprep.subr.mxu0 0.0
        %v658 = vand.u32 %v294, 4294901760
        %659 = vmatpush1.msra.mxu0 %v658
        %660 = vmatprep.subr.mxu0 0.0
        %v661 = vand.u32 %v295, 4294901760
        %662 = vmatpush1.msra.mxu0 %v661
        %663 = vmatprep.subr.mxu0 0.0
        %v664 = vand.u32 %v296, 4294901760
        %665 = vmatpush1.msra.mxu0 %v664
        %666 = vmatprep.subr.mxu0 0.0
        %v667 = vand.u32 %v297, 4294901760
        %668 = vmatpush1.msra.mxu0 %v667
        %669 = vmatprep.subr.mxu0 0.0
        %v670 = vand.u32 %v298, 4294901760
        %671 = vmatpush1.msra.mxu0 %v670
        %672 = vmatprep.subr.mxu0 0.0
        %v673 = vand.u32 %v299, 4294901760
        %674 = vmatpush1.msra.mxu0 %v673
        %675 = vmatprep.subr.mxu0 0.0
        %v676 = vand.u32 %v300, 4294901760
        %677 = vmatpush1.msra.mxu0 %v676
        %678 = vmatprep.subr.mxu0 0.0
        %v679 = vand.u32 %v301, 4294901760
        %680 = vmatpush1.msra.mxu0 %v679
        %681 = vmatprep.subr.mxu0 0.0
        %v682 = vand.u32 %v302, 4294901760
        %683 = vmatpush1.msra.mxu0 %v682
        %684 = vmatprep.subr.mxu0 0.0
        %v685 = vand.u32 %v303, 4294901760
        %686 = vmatpush1.msra.mxu0 %v685
        %687 = vmatprep.subr.mxu0 0.0
        %v688 = vand.u32 %v304, 4294901760
        %689 = vmatpush1.msra.mxu0 %v688
        %690 = vmatprep.subr.mxu0 0.0
        %v691 = vand.u32 %v305, 4294901760
        %692 = vmatpush1.msra.mxu0 %v691
        %693 = vmatprep.subr.mxu0 0.0
        %v694 = vand.u32 %v306, 4294901760
        %695 = vmatpush1.msra.mxu0 %v694
        %696 = vmatprep.subr.mxu0 0.0
        %v697 = vand.u32 %v307, 4294901760
        %698 = vmatpush1.msra.mxu0 %v697
        %699 = vmatprep.subr.mxu0 0.0
        %v700 = vand.u32 %v308, 4294901760
        %701 = vmatpush1.msra.mxu0 %v700
        %702 = vmatprep.subr.mxu0 0.0
        %v703 = vand.u32 %v309, 4294901760
        %704 = vmatpush1.msra.mxu0 %v703
        %705 = vmatprep.subr.mxu0 0.0
        %706 = vmatpush1.msra.mxu0 0.0
        %707 = vmatprep.subr.mxu0 0.0
        %708 = vmatpush1.msra.mxu0 0.0
        %709 = vmatprep.subr.mxu0 0.0
        %710 = vmatpush1.msra.mxu0 0.0
        %711 = vmatprep.subr.mxu0 0.0
        %712 = vmatpush1.msra.mxu0 0.0
        %713 = vmatprep.subr.mxu0 0.0
        %714 = vmatpush1.msra.mxu0 0.0
        %715 = vmatprep.subr.mxu0 0.0
        %716 = vmatpush1.msra.mxu0 0.0
        %717 = vmatprep.subr.mxu0 0.0
        %718 = vmatpush1.msra.mxu0 0.0
        %719 = vmatprep.subr.mxu0 0.0
        %720 = vmatpush1.msra.mxu0 0.0
        %721 = vmatprep.subr.mxu0 0.0
        %722 = vmatpush1.msra.mxu0 0.0
        %723 = vmatprep.subr.mxu0 0.0
        %724 = vmatpush1.msra.mxu0 0.0
        %725 = vmatprep.subr.mxu0 0.0
        %726 = vmatpush1.msra.mxu0 0.0
        %727 = vmatprep.subr.mxu0 0.0
        %728 = vmatpush1.msra.mxu0 0.0
        %729 = vmatprep.subr.mxu0 0.0
        %730 = vmatpush1.msra.mxu0 0.0
        %731 = vmatprep.subr.mxu0 0.0
        %732 = vmatpush1.msra.mxu0 0.0
        %733 = vmatprep.subr.mxu0 0.0
        %734 = vmatpush1.msra.mxu0 0.0
        %735 = vmatprep.subr.mxu0 0.0
        %736 = vmatpush1.msra.mxu0 0.0
        %737 = vmatprep.mubr.f32.mxu0 0.0
        %v738 = vand.u32 %v285, 4294901760
        %v739 = vsub.f32 %v285, %v738
        %v740 = vand.u32 %v739, 4294901760
        %741 = vmatmul.mubr.f32.gmra.mrb[0].mxu0 %v740
        %v742 = vpop.f32.mrb[0].mxu0
        %v743 = vadd.f32 %v654, %v742
        %v744 = vpop.f32.mrb[0].mxu0
        %745 = vdwg.mxu0
        %746 = vmatprep.subr.mxu0 0.0
        %v747 = vand.u32 %v294, 4294901760
        %v748 = vsub.f32 %v294, %v747
        %v749 = vand.u32 %v748, 4294901760
        %750 = vmatpush1.msra.mxu0 %v749
        %751 = vmatprep.subr.mxu0 0.0
        %v752 = vand.u32 %v295, 4294901760
        %v753 = vsub.f32 %v295, %v752
        %v754 = vand.u32 %v753, 4294901760
        %755 = vmatpush1.msra.mxu0 %v754
        %756 = vmatprep.subr.mxu0 0.0
        %v757 = vand.u32 %v296, 4294901760
        %v758 = vsub.f32 %v296, %v757
        %v759 = vand.u32 %v758, 4294901760
        %760 = vmatpush1.msra.mxu0 %v759
        %761 = vmatprep.subr.mxu0 0.0
        %v762 = vand.u32 %v297, 4294901760
        %v763 = vsub.f32 %v297, %v762
        %v764 = vand.u32 %v763, 4294901760
        %765 = vmatpush1.msra.mxu0 %v764
        %766 = vmatprep.subr.mxu0 0.0
        %v767 = vand.u32 %v298, 4294901760
        %v768 = vsub.f32 %v298, %v767
        %v769 = vand.u32 %v768, 4294901760
        %770 = vmatpush1.msra.mxu0 %v769
        %771 = vmatprep.subr.mxu0 0.0
        %v772 = vand.u32 %v299, 4294901760
        %v773 = vsub.f32 %v299, %v772
        %v774 = vand.u32 %v773, 4294901760
        %775 = vmatpush1.msra.mxu0 %v774
        %776 = vmatprep.subr.mxu0 0.0
        %v777 = vand.u32 %v300, 4294901760
        %v778 = vsub.f32 %v300, %v777
        %v779 = vand.u32 %v778, 4294901760
        %780 = vmatpush1.msra.mxu0 %v779
        %781 = vmatprep.subr.mxu0 0.0
        %v782 = vand.u32 %v301, 4294901760
        %v783 = vsub.f32 %v301, %v782
        %v784 = vand.u32 %v783, 4294901760
        %785 = vmatpush1.msra.mxu0 %v784
        %786 = vmatprep.subr.mxu0 0.0
        %v787 = vand.u32 %v302, 4294901760
        %v788 = vsub.f32 %v302, %v787
        %v789 = vand.u32 %v788, 4294901760
        %790 = vmatpush1.msra.mxu0 %v789
        %791 = vmatprep.subr.mxu0 0.0
        %v792 = vand.u32 %v303, 4294901760
        %v793 = vsub.f32 %v303, %v792
        %v794 = vand.u32 %v793, 4294901760
        %795 = vmatpush1.msra.mxu0 %v794
        %796 = vmatprep.subr.mxu0 0.0
        %v797 = vand.u32 %v304, 4294901760
        %v798 = vsub.f32 %v304, %v797
        %v799 = vand.u32 %v798, 4294901760
        %800 = vmatpush1.msra.mxu0 %v799
        %801 = vmatprep.subr.mxu0 0.0
        %v802 = vand.u32 %v305, 4294901760
        %v803 = vsub.f32 %v305, %v802
        %v804 = vand.u32 %v803, 4294901760
        %805 = vmatpush1.msra.mxu0 %v804
        %806 = vmatprep.subr.mxu0 0.0
        %v807 = vand.u32 %v306, 4294901760
        %v808 = vsub.f32 %v306, %v807
        %v809 = vand.u32 %v808, 4294901760
        %810 = vmatpush1.msra.mxu0 %v809
        %811 = vmatprep.subr.mxu0 0.0
        %v812 = vand.u32 %v307, 4294901760
        %v813 = vsub.f32 %v307, %v812
        %v814 = vand.u32 %v813, 4294901760
        %815 = vmatpush1.msra.mxu0 %v814
        %816 = vmatprep.subr.mxu0 0.0
        %v817 = vand.u32 %v308, 4294901760
        %v818 = vsub.f32 %v308, %v817
        %v819 = vand.u32 %v818, 4294901760
        %820 = vmatpush1.msra.mxu0 %v819
        %821 = vmatprep.subr.mxu0 0.0
        %v822 = vand.u32 %v309, 4294901760
        %v823 = vsub.f32 %v309, %v822
        %v824 = vand.u32 %v823, 4294901760
        %825 = vmatpush1.msra.mxu0 %v824
        %826 = vmatprep.subr.mxu0 0.0
        %827 = vmatpush1.msra.mxu0 0.0
        %828 = vmatprep.subr.mxu0 0.0
        %829 = vmatpush1.msra.mxu0 0.0
        %830 = vmatprep.subr.mxu0 0.0
        %831 = vmatpush1.msra.mxu0 0.0
        %832 = vmatprep.subr.mxu0 0.0
        %833 = vmatpush1.msra.mxu0 0.0
        %834 = vmatprep.subr.mxu0 0.0
        %835 = vmatpush1.msra.mxu0 0.0
        %836 = vmatprep.subr.mxu0 0.0
        %837 = vmatpush1.msra.mxu0 0.0
        %838 = vmatprep.subr.mxu0 0.0
        %839 = vmatpush1.msra.mxu0 0.0
        %840 = vmatprep.subr.mxu0 0.0
        %841 = vmatpush1.msra.mxu0 0.0
        %842 = vmatprep.subr.mxu0 0.0
        %843 = vmatpush1.msra.mxu0 0.0
        %844 = vmatprep.subr.mxu0 0.0
        %845 = vmatpush1.msra.mxu0 0.0
        %846 = vmatprep.subr.mxu0 0.0
        %847 = vmatpush1.msra.mxu0 0.0
        %848 = vmatprep.subr.mxu0 0.0
        %849 = vmatpush1.msra.mxu0 0.0
        %850 = vmatprep.subr.mxu0 0.0
        %851 = vmatpush1.msra.mxu0 0.0
        %852 = vmatprep.subr.mxu0 0.0
        %853 = vmatpush1.msra.mxu0 0.0
        %854 = vmatprep.subr.mxu0 0.0
        %855 = vmatpush1.msra.mxu0 0.0
        %856 = vmatprep.subr.mxu0 0.0
        %857 = vmatpush1.msra.mxu0 0.0
        %858 = vmatprep.mubr.f32.mxu0 0.0
        %v859 = vand.u32 %v285, 4294901760
        %860 = vmatmul.mubr.f32.gmra.mrb[0].mxu0 %v859
        %v861 = vpop.f32.mrb[0].mxu0
        %v862 = vadd.f32 %v743, %v861
        %v863 = vpop.f32.mrb[0].mxu0
        %864 = vdwg.mxu0
        %865 = vmatprep.subr.mxu0 0.0
        %v866 = vand.u32 %v294, 4294901760
        %867 = vmatpush1.msra.mxu0 %v866
        %868 = vmatprep.subr.mxu0 0.0
        %v869 = vand.u32 %v295, 4294901760
        %870 = vmatpush1.msra.mxu0 %v869
        %871 = vmatprep.subr.mxu0 0.0
        %v872 = vand.u32 %v296, 4294901760
        %873 = vmatpush1.msra.mxu0 %v872
        %874 = vmatprep.subr.mxu0 0.0
        %v875 = vand.u32 %v297, 4294901760
        %876 = vmatpush1.msra.mxu0 %v875
        %877 = vmatprep.subr.mxu0 0.0
        %v878 = vand.u32 %v298, 4294901760
        %879 = vmatpush1.msra.mxu0 %v878
        %880 = vmatprep.subr.mxu0 0.0
        %v881 = vand.u32 %v299, 4294901760
        %882 = vmatpush1.msra.mxu0 %v881
        %883 = vmatprep.subr.mxu0 0.0
        %v884 = vand.u32 %v300, 4294901760
        %885 = vmatpush1.msra.mxu0 %v884
        %886 = vmatprep.subr.mxu0 0.0
        %v887 = vand.u32 %v301, 4294901760
        %888 = vmatpush1.msra.mxu0 %v887
        %889 = vmatprep.subr.mxu0 0.0
        %v890 = vand.u32 %v302, 4294901760
        %891 = vmatpush1.msra.mxu0 %v890
        %892 = vmatprep.subr.mxu0 0.0
        %v893 = vand.u32 %v303, 4294901760
        %894 = vmatpush1.msra.mxu0 %v893
        %895 = vmatprep.subr.mxu0 0.0
        %v896 = vand.u32 %v304, 4294901760
        %897 = vmatpush1.msra.mxu0 %v896
        %898 = vmatprep.subr.mxu0 0.0
        %v899 = vand.u32 %v305, 4294901760
        %900 = vmatpush1.msra.mxu0 %v899
        %901 = vmatprep.subr.mxu0 0.0
        %v902 = vand.u32 %v306, 4294901760
        %903 = vmatpush1.msra.mxu0 %v902
        %904 = vmatprep.subr.mxu0 0.0
        %v905 = vand.u32 %v307, 4294901760
        %906 = vmatpush1.msra.mxu0 %v905
        %907 = vmatprep.subr.mxu0 0.0
        %v908 = vand.u32 %v308, 4294901760
        %909 = vmatpush1.msra.mxu0 %v908
        %910 = vmatprep.subr.mxu0 0.0
        %v911 = vand.u32 %v309, 4294901760
        %912 = vmatpush1.msra.mxu0 %v911
        %913 = vmatprep.subr.mxu0 0.0
        %914 = vmatpush1.msra.mxu0 0.0
        %915 = vmatprep.subr.mxu0 0.0
        %916 = vmatpush1.msra.mxu0 0.0
        %917 = vmatprep.subr.mxu0 0.0
        %918 = vmatpush1.msra.mxu0 0.0
        %919 = vmatprep.subr.mxu0 0.0
        %920 = vmatpush1.msra.mxu0 0.0
        %921 = vmatprep.subr.mxu0 0.0
        %922 = vmatpush1.msra.mxu0 0.0
        %923 = vmatprep.subr.mxu0 0.0
        %924 = vmatpush1.msra.mxu0 0.0
        %925 = vmatprep.subr.mxu0 0.0
        %926 = vmatpush1.msra.mxu0 0.0
        %927 = vmatprep.subr.mxu0 0.0
        %928 = vmatpush1.msra.mxu0 0.0
        %929 = vmatprep.subr.mxu0 0.0
        %930 = vmatpush1.msra.mxu0 0.0
        %931 = vmatprep.subr.mxu0 0.0
        %932 = vmatpush1.msra.mxu0 0.0
        %933 = vmatprep.subr.mxu0 0.0
        %934 = vmatpush1.msra.mxu0 0.0
        %935 = vmatprep.subr.mxu0 0.0
        %936 = vmatpush1.msra.mxu0 0.0
        %937 = vmatprep.subr.mxu0 0.0
        %938 = vmatpush1.msra.mxu0 0.0
        %939 = vmatprep.subr.mxu0 0.0
        %940 = vmatpush1.msra.mxu0 0.0
        %941 = vmatprep.subr.mxu0 0.0
        %942 = vmatpush1.msra.mxu0 0.0
        %943 = vmatprep.subr.mxu0 0.0
        %944 = vmatpush1.msra.mxu0 0.0
        %945 = vmatprep.mubr.f32.mxu0 0.0
        %v946 = vand.u32 %v285, 4294901760
        %947 = vmatmul.mubr.f32.gmra.mrb[0].mxu0 %v946
        %v948 = vpop.f32.mrb[0].mxu0
        %v949 = vadd.f32 %v862, %v948
        %v950 = vpop.f32.mrb[0].mxu0
        %951 = vdwg.mxu0
        %952 = vmatprep.subr.mxu0 0.0
        %v953 = vand.u32 %v294, 4294901760
        %954 = vmatpush1.msra.mxu0 %v953
        %955 = vmatprep.subr.mxu0 0.0
        %v956 = vand.u32 %v295, 4294901760
        %957 = vmatpush1.msra.mxu0 %v956
        %958 = vmatprep.subr.mxu0 0.0
        %v959 = vand.u32 %v296, 4294901760
        %960 = vmatpush1.msra.mxu0 %v959
        %961 = vmatprep.subr.mxu0 0.0
        %v962 = vand.u32 %v297, 4294901760
        %963 = vmatpush1.msra.mxu0 %v962
        %964 = vmatprep.subr.mxu0 0.0
        %v965 = vand.u32 %v298, 4294901760
        %966 = vmatpush1.msra.mxu0 %v965
        %967 = vmatprep.subr.mxu0 0.0
        %v968 = vand.u32 %v299, 4294901760
        %969 = vmatpush1.msra.mxu0 %v968
        %970 = vmatprep.subr.mxu0 0.0
        %v971 = vand.u32 %v300, 4294901760
        %972 = vmatpush1.msra.mxu0 %v971
        %973 = vmatprep.subr.mxu0 0.0
        %v974 = vand.u32 %v301, 4294901760
        %975 = vmatpush1.msra.mxu0 %v974
        %976 = vmatprep.subr.mxu0 0.0
        %v977 = vand.u32 %v302, 4294901760
        %978 = vmatpush1.msra.mxu0 %v977
        %979 = vmatprep.subr.mxu0 0.0
        %v980 = vand.u32 %v303, 4294901760
        %981 = vmatpush1.msra.mxu0 %v980
        %982 = vmatprep.subr.mxu0 0.0
        %v983 = vand.u32 %v304, 4294901760
        %984 = vmatpush1.msra.mxu0 %v983
        %985 = vmatprep.subr.mxu0 0.0
        %v986 = vand.u32 %v305, 4294901760
        %987 = vmatpush1.msra.mxu0 %v986
        %988 = vmatprep.subr.mxu0 0.0
        %v989 = vand.u32 %v306, 4294901760
        %990 = vmatpush1.msra.mxu0 %v989
        %991 = vmatprep.subr.mxu0 0.0
        %v992 = vand.u32 %v307, 4294901760
        %993 = vmatpush1.msra.mxu0 %v992
        %994 = vmatprep.subr.mxu0 0.0
        %v995 = vand.u32 %v308, 4294901760
        %996 = vmatpush1.msra.mxu0 %v995
        %997 = vmatprep.subr.mxu0 0.0
        %v998 = vand.u32 %v309, 4294901760
        %999 = vmatpush1.msra.mxu0 %v998
        %1000 = vmatprep.subr.mxu0 0.0
        %1001 = vmatpush1.msra.mxu0 0.0
        %1002 = vmatprep.subr.mxu0 0.0
        %1003 = vmatpush1.msra.mxu0 0.0
        %1004 = vmatprep.subr.mxu0 0.0
        %1005 = vmatpush1.msra.mxu0 0.0
        %1006 = vmatprep.subr.mxu0 0.0
        %1007 = vmatpush1.msra.mxu0 0.0
        %1008 = vmatprep.subr.mxu0 0.0
        %1009 = vmatpush1.msra.mxu0 0.0
        %1010 = vmatprep.subr.mxu0 0.0
        %1011 = vmatpush1.msra.mxu0 0.0
        %1012 = vmatprep.subr.mxu0 0.0
        %1013 = vmatpush1.msra.mxu0 0.0
        %1014 = vmatprep.subr.mxu0 0.0
        %1015 = vmatpush1.msra.mxu0 0.0
        %1016 = vmatprep.subr.mxu0 0.0
        %1017 = vmatpush1.msra.mxu0 0.0
        %1018 = vmatprep.subr.mxu0 0.0
        %1019 = vmatpush1.msra.mxu0 0.0
        %1020 = vmatprep.subr.mxu0 0.0
        %1021 = vmatpush1.msra.mxu0 0.0
        %1022 = vmatprep.subr.mxu0 0.0
        %1023 = vmatpush1.msra.mxu0 0.0
        %1024 = vmatprep.subr.mxu0 0.0
        %1025 = vmatpush1.msra.mxu0 0.0
        %1026 = vmatprep.subr.mxu0 0.0
        %1027 = vmatpush1.msra.mxu0 0.0
        %1028 = vmatprep.subr.mxu0 0.0
        %1029 = vmatpush1.msra.mxu0 0.0
        %1030 = vmatprep.subr.mxu0 0.0
        %1031 = vmatpush1.msra.mxu0 0.0
        %1032 = vmatprep.mubr.f32.mxu0 0.0
        %v1033 = vand.u32 %v293, 4294901760
        %v1034 = vsub.f32 %v293, %v1033
        %v1035 = vand.u32 %v1034, 4294901760
        %v1036 = vsub.f32 %v1034, %v1035
        %v1037 = vand.u32 %v1036, 4294901760
        %1038 = vmatmul.mubr.f32.gmra.mrb[0].mxu0 %v1037
        %v1039 = vpop.f32.mrb[0].mxu0
        %v1040 = vadd.f32 0.0, %v1039
        %v1041 = vpop.f32.mrb[0].mxu0
        %1042 = vdwg.mxu0
        %1043 = vmatprep.subr.mxu0 0.0
        %v1044 = vand.u32 %v294, 4294901760
        %v1045 = vsub.f32 %v294, %v1044
        %v1046 = vand.u32 %v1045, 4294901760
        %v1047 = vsub.f32 %v1045, %v1046
        %v1048 = vand.u32 %v1047, 4294901760
        %1049 = vmatpush1.msra.mxu0 %v1048
        %1050 = vmatprep.subr.mxu0 0.0
        %v1051 = vand.u32 %v295, 4294901760
        %v1052 = vsub.f32 %v295, %v1051
        %v1053 = vand.u32 %v1052, 4294901760
        %v1054 = vsub.f32 %v1052, %v1053
        %v1055 = vand.u32 %v1054, 4294901760
        %1056 = vmatpush1.msra.mxu0 %v1055
        %1057 = vmatprep.subr.mxu0 0.0
        %v1058 = vand.u32 %v296, 4294901760
        %v1059 = vsub.f32 %v296, %v1058
        %v1060 = vand.u32 %v1059, 4294901760
        %v1061 = vsub.f32 %v1059, %v1060
        %v1062 = vand.u32 %v1061, 4294901760
        %1063 = vmatpush1.msra.mxu0 %v1062
        %1064 = vmatprep.subr.mxu0 0.0
        %v1065 = vand.u32 %v297, 4294901760
        %v1066 = vsub.f32 %v297, %v1065
        %v1067 = vand.u32 %v1066, 4294901760
        %v1068 = vsub.f32 %v1066, %v1067
        %v1069 = vand.u32 %v1068, 4294901760
        %1070 = vmatpush1.msra.mxu0 %v1069
        %1071 = vmatprep.subr.mxu0 0.0
        %v1072 = vand.u32 %v298, 4294901760
        %v1073 = vsub.f32 %v298, %v1072
        %v1074 = vand.u32 %v1073, 4294901760
        %v1075 = vsub.f32 %v1073, %v1074
        %v1076 = vand.u32 %v1075, 4294901760
        %1077 = vmatpush1.msra.mxu0 %v1076
        %1078 = vmatprep.subr.mxu0 0.0
        %v1079 = vand.u32 %v299, 4294901760
        %v1080 = vsub.f32 %v299, %v1079
        %v1081 = vand.u32 %v1080, 4294901760
        %v1082 = vsub.f32 %v1080, %v1081
        %v1083 = vand.u32 %v1082, 4294901760
        %1084 = vmatpush1.msra.mxu0 %v1083
        %1085 = vmatprep.subr.mxu0 0.0
        %v1086 = vand.u32 %v300, 4294901760
        %v1087 = vsub.f32 %v300, %v1086
        %v1088 = vand.u32 %v1087, 4294901760
        %v1089 = vsub.f32 %v1087, %v1088
        %v1090 = vand.u32 %v1089, 4294901760
        %1091 = vmatpush1.msra.mxu0 %v1090
        %1092 = vmatprep.subr.mxu0 0.0
        %v1093 = vand.u32 %v301, 4294901760
        %v1094 = vsub.f32 %v301, %v1093
        %v1095 = vand.u32 %v1094, 4294901760
        %v1096 = vsub.f32 %v1094, %v1095
        %v1097 = vand.u32 %v1096, 4294901760
        %1098 = vmatpush1.msra.mxu0 %v1097
        %1099 = vmatprep.subr.mxu0 0.0
        %v1100 = vand.u32 %v302, 4294901760
        %v1101 = vsub.f32 %v302, %v1100
        %v1102 = vand.u32 %v1101, 4294901760
        %v1103 = vsub.f32 %v1101, %v1102
        %v1104 = vand.u32 %v1103, 4294901760
        %1105 = vmatpush1.msra.mxu0 %v1104
        %1106 = vmatprep.subr.mxu0 0.0
        %v1107 = vand.u32 %v303, 4294901760
        %v1108 = vsub.f32 %v303, %v1107
        %v1109 = vand.u32 %v1108, 4294901760
        %v1110 = vsub.f32 %v1108, %v1109
        %v1111 = vand.u32 %v1110, 4294901760
        %1112 = vmatpush1.msra.mxu0 %v1111
        %1113 = vmatprep.subr.mxu0 0.0
        %v1114 = vand.u32 %v304, 4294901760
        %v1115 = vsub.f32 %v304, %v1114
        %v1116 = vand.u32 %v1115, 4294901760
        %v1117 = vsub.f32 %v1115, %v1116
        %v1118 = vand.u32 %v1117, 4294901760
        %1119 = vmatpush1.msra.mxu0 %v1118
        %1120 = vmatprep.subr.mxu0 0.0
        %v1121 = vand.u32 %v305, 4294901760
        %v1122 = vsub.f32 %v305, %v1121
        %v1123 = vand.u32 %v1122, 4294901760
        %v1124 = vsub.f32 %v1122, %v1123
        %v1125 = vand.u32 %v1124, 4294901760
        %1126 = vmatpush1.msra.mxu0 %v1125
        %1127 = vmatprep.subr.mxu0 0.0
        %v1128 = vand.u32 %v306, 4294901760
        %v1129 = vsub.f32 %v306, %v1128
        %v1130 = vand.u32 %v1129, 4294901760
        %v1131 = vsub.f32 %v1129, %v1130
        %v1132 = vand.u32 %v1131, 4294901760
        %1133 = vmatpush1.msra.mxu0 %v1132
        %1134 = vmatprep.subr.mxu0 0.0
        %v1135 = vand.u32 %v307, 4294901760
        %v1136 = vsub.f32 %v307, %v1135
        %v1137 = vand.u32 %v1136, 4294901760
        %v1138 = vsub.f32 %v1136, %v1137
        %v1139 = vand.u32 %v1138, 4294901760
        %1140 = vmatpush1.msra.mxu0 %v1139
        %1141 = vmatprep.subr.mxu0 0.0
        %v1142 = vand.u32 %v308, 4294901760
        %v1143 = vsub.f32 %v308, %v1142
        %v1144 = vand.u32 %v1143, 4294901760
        %v1145 = vsub.f32 %v1143, %v1144
        %v1146 = vand.u32 %v1145, 4294901760
        %1147 = vmatpush1.msra.mxu0 %v1146
        %1148 = vmatprep.subr.mxu0 0.0
        %v1149 = vand.u32 %v309, 4294901760
        %v1150 = vsub.f32 %v309, %v1149
        %v1151 = vand.u32 %v1150, 4294901760
        %v1152 = vsub.f32 %v1150, %v1151
        %v1153 = vand.u32 %v1152, 4294901760
        %1154 = vmatpush1.msra.mxu0 %v1153
        %1155 = vmatprep.subr.mxu0 0.0
        %1156 = vmatpush1.msra.mxu0 0.0
        %1157 = vmatprep.subr.mxu0 0.0
        %1158 = vmatpush1.msra.mxu0 0.0
        %1159 = vmatprep.subr.mxu0 0.0
        %1160 = vmatpush1.msra.mxu0 0.0
        %1161 = vmatprep.subr.mxu0 0.0
        %1162 = vmatpush1.msra.mxu0 0.0
        %1163 = vmatprep.subr.mxu0 0.0
        %1164 = vmatpush1.msra.mxu0 0.0
        %1165 = vmatprep.subr.mxu0 0.0
        %1166 = vmatpush1.msra.mxu0 0.0
        %1167 = vmatprep.subr.mxu0 0.0
        %1168 = vmatpush1.msra.mxu0 0.0
        %1169 = vmatprep.subr.mxu0 0.0
        %1170 = vmatpush1.msra.mxu0 0.0
        %1171 = vmatprep.subr.mxu0 0.0
        %1172 = vmatpush1.msra.mxu0 0.0
        %1173 = vmatprep.subr.mxu0 0.0
        %1174 = vmatpush1.msra.mxu0 0.0
        %1175 = vmatprep.subr.mxu0 0.0
        %1176 = vmatpush1.msra.mxu0 0.0
        %1177 = vmatprep.subr.mxu0 0.0
        %1178 = vmatpush1.msra.mxu0 0.0
        %1179 = vmatprep.subr.mxu0 0.0
        %1180 = vmatpush1.msra.mxu0 0.0
        %1181 = vmatprep.subr.mxu0 0.0
        %1182 = vmatpush1.msra.mxu0 0.0
        %1183 = vmatprep.subr.mxu0 0.0
        %1184 = vmatpush1.msra.mxu0 0.0
        %1185 = vmatprep.subr.mxu0 0.0
        %1186 = vmatpush1.msra.mxu0 0.0
        %1187 = vmatprep.mubr.f32.mxu0 0.0
        %v1188 = vand.u32 %v293, 4294901760
        %1189 = vmatmul.mubr.f32.gmra.mrb[0].mxu0 %v1188
        %v1190 = vpop.f32.mrb[0].mxu0
        %v1191 = vadd.f32 %v1040, %v1190
        %v1192 = vpop.f32.mrb[0].mxu0
        %1193 = vdwg.mxu0
        %1194 = vmatprep.subr.mxu0 0.0
        %v1195 = vand.u32 %v294, 4294901760
        %v1196 = vsub.f32 %v294, %v1195
        %1197 = vmatpush1.msra.mxu0 %v1196
        %1198 = vmatprep.subr.mxu0 0.0
        %v1199 = vand.u32 %v295, 4294901760
        %v1200 = vsub.f32 %v295, %v1199
        %1201 = vmatpush1.msra.mxu0 %v1200
        %1202 = vmatprep.subr.mxu0 0.0
        %v1203 = vand.u32 %v296, 4294901760
        %v1204 = vsub.f32 %v296, %v1203
        %1205 = vmatpush1.msra.mxu0 %v1204
        %1206 = vmatprep.subr.mxu0 0.0
        %v1207 = vand.u32 %v297, 4294901760
        %v1208 = vsub.f32 %v297, %v1207
        %1209 = vmatpush1.msra.mxu0 %v1208
        %1210 = vmatprep.subr.mxu0 0.0
        %v1211 = vand.u32 %v298, 4294901760
        %v1212 = vsub.f32 %v298, %v1211
        %1213 = vmatpush1.msra.mxu0 %v1212
        %1214 = vmatprep.subr.mxu0 0.0
        %v1215 = vand.u32 %v299, 4294901760
        %v1216 = vsub.f32 %v299, %v1215
        %1217 = vmatpush1.msra.mxu0 %v1216
        %1218 = vmatprep.subr.mxu0 0.0
        %v1219 = vand.u32 %v300, 4294901760
        %v1220 = vsub.f32 %v300, %v1219
        %1221 = vmatpush1.msra.mxu0 %v1220
        %1222 = vmatprep.subr.mxu0 0.0
        %v1223 = vand.u32 %v301, 4294901760
        %v1224 = vsub.f32 %v301, %v1223
        %1225 = vmatpush1.msra.mxu0 %v1224
        %1226 = vmatprep.subr.mxu0 0.0
        %v1227 = vand.u32 %v302, 4294901760
        %v1228 = vsub.f32 %v302, %v1227
        %1229 = vmatpush1.msra.mxu0 %v1228
        %1230 = vmatprep.subr.mxu0 0.0
        %v1231 = vand.u32 %v303, 4294901760
        %v1232 = vsub.f32 %v303, %v1231
        %1233 = vmatpush1.msra.mxu0 %v1232
        %1234 = vmatprep.subr.mxu0 0.0
        %v1235 = vand.u32 %v304, 4294901760
        %v1236 = vsub.f32 %v304, %v1235
        %1237 = vmatpush1.msra.mxu0 %v1236
        %1238 = vmatprep.subr.mxu0 0.0
        %v1239 = vand.u32 %v305, 4294901760
        %v1240 = vsub.f32 %v305, %v1239
        %1241 = vmatpush1.msra.mxu0 %v1240
        %1242 = vmatprep.subr.mxu0 0.0
        %v1243 = vand.u32 %v306, 4294901760
        %v1244 = vsub.f32 %v306, %v1243
        %1245 = vmatpush1.msra.mxu0 %v1244
        %1246 = vmatprep.subr.mxu0 0.0
        %v1247 = vand.u32 %v307, 4294901760
        %v1248 = vsub.f32 %v307, %v1247
        %1249 = vmatpush1.msra.mxu0 %v1248
        %1250 = vmatprep.subr.mxu0 0.0
        %v1251 = vand.u32 %v308, 4294901760
        %v1252 = vsub.f32 %v308, %v1251
        %1253 = vmatpush1.msra.mxu0 %v1252
        %1254 = vmatprep.subr.mxu0 0.0
        %v1255 = vand.u32 %v309, 4294901760
        %v1256 = vsub.f32 %v309, %v1255
        %1257 = vmatpush1.msra.mxu0 %v1256
        %1258 = vmatprep.subr.mxu0 0.0
        %1259 = vmatpush1.msra.mxu0 0.0
        %1260 = vmatprep.subr.mxu0 0.0
        %1261 = vmatpush1.msra.mxu0 0.0
        %1262 = vmatprep.subr.mxu0 0.0
        %1263 = vmatpush1.msra.mxu0 0.0
        %1264 = vmatprep.subr.mxu0 0.0
        %1265 = vmatpush1.msra.mxu0 0.0
        %1266 = vmatprep.subr.mxu0 0.0
        %1267 = vmatpush1.msra.mxu0 0.0
        %1268 = vmatprep.subr.mxu0 0.0
        %1269 = vmatpush1.msra.mxu0 0.0
        %1270 = vmatprep.subr.mxu0 0.0
        %1271 = vmatpush1.msra.mxu0 0.0
        %1272 = vmatprep.subr.mxu0 0.0
        %1273 = vmatpush1.msra.mxu0 0.0
        %1274 = vmatprep.subr.mxu0 0.0
        %1275 = vmatpush1.msra.mxu0 0.0
        %1276 = vmatprep.subr.mxu0 0.0
        %1277 = vmatpush1.msra.mxu0 0.0
        %1278 = vmatprep.subr.mxu0 0.0
        %1279 = vmatpush1.msra.mxu0 0.0
        %1280 = vmatprep.subr.mxu0 0.0
        %1281 = vmatpush1.msra.mxu0 0.0
        %1282 = vmatprep.subr.mxu0 0.0
        %1283 = vmatpush1.msra.mxu0 0.0
        %1284 = vmatprep.subr.mxu0 0.0
        %1285 = vmatpush1.msra.mxu0 0.0
        %1286 = vmatprep.subr.mxu0 0.0
        %1287 = vmatpush1.msra.mxu0 0.0
        %1288 = vmatprep.subr.mxu0 0.0
        %1289 = vmatpush1.msra.mxu0 0.0
        %1290 = vmatprep.mubr.f32.mxu0 0.0
        %v1291 = vand.u32 %v293, 4294901760
        %v1292 = vsub.f32 %v293, %v1291
        %1293 = vmatmul.mubr.f32.gmra.mrb[0].mxu0 %v1292
        %v1294 = vpop.f32.mrb[0].mxu0
        %v1295 = vadd.f32 %v1191, %v1294
        %v1296 = vpop.f32.mrb[0].mxu0
        %1297 = vdwg.mxu0
        %1298 = vmatprep.subr.mxu0 0.0
        %v1299 = vand.u32 %v294, 4294901760
        %1300 = vmatpush1.msra.mxu0 %v1299
        %1301 = vmatprep.subr.mxu0 0.0
        %v1302 = vand.u32 %v295, 4294901760
        %1303 = vmatpush1.msra.mxu0 %v1302
        %1304 = vmatprep.subr.mxu0 0.0
        %v1305 = vand.u32 %v296, 4294901760
        %1306 = vmatpush1.msra.mxu0 %v1305
        %1307 = vmatprep.subr.mxu0 0.0
        %v1308 = vand.u32 %v297, 4294901760
        %1309 = vmatpush1.msra.mxu0 %v1308
        %1310 = vmatprep.subr.mxu0 0.0
        %v1311 = vand.u32 %v298, 4294901760
        %1312 = vmatpush1.msra.mxu0 %v1311
        %1313 = vmatprep.subr.mxu0 0.0
        %v1314 = vand.u32 %v299, 4294901760
        %1315 = vmatpush1.msra.mxu0 %v1314
        %1316 = vmatprep.subr.mxu0 0.0
        %v1317 = vand.u32 %v300, 4294901760
        %1318 = vmatpush1.msra.mxu0 %v1317
        %1319 = vmatprep.subr.mxu0 0.0
        %v1320 = vand.u32 %v301, 4294901760
        %1321 = vmatpush1.msra.mxu0 %v1320
        %1322 = vmatprep.subr.mxu0 0.0
        %v1323 = vand.u32 %v302, 4294901760
        %1324 = vmatpush1.msra.mxu0 %v1323
        %1325 = vmatprep.subr.mxu0 0.0
        %v1326 = vand.u32 %v303, 4294901760
        %1327 = vmatpush1.msra.mxu0 %v1326
        %1328 = vmatprep.subr.mxu0 0.0
        %v1329 = vand.u32 %v304, 4294901760
        %1330 = vmatpush1.msra.mxu0 %v1329
        %1331 = vmatprep.subr.mxu0 0.0
        %v1332 = vand.u32 %v305, 4294901760
        %1333 = vmatpush1.msra.mxu0 %v1332
        %1334 = vmatprep.subr.mxu0 0.0
        %v1335 = vand.u32 %v306, 4294901760
        %1336 = vmatpush1.msra.mxu0 %v1335
        %1337 = vmatprep.subr.mxu0 0.0
        %v1338 = vand.u32 %v307, 4294901760
        %1339 = vmatpush1.msra.mxu0 %v1338
        %1340 = vmatprep.subr.mxu0 0.0
        %v1341 = vand.u32 %v308, 4294901760
        %1342 = vmatpush1.msra.mxu0 %v1341
        %1343 = vmatprep.subr.mxu0 0.0
        %v1344 = vand.u32 %v309, 4294901760
        %1345 = vmatpush1.msra.mxu0 %v1344
        %1346 = vmatprep.subr.mxu0 0.0
        %1347 = vmatpush1.msra.mxu0 0.0
        %1348 = vmatprep.subr.mxu0 0.0
        %1349 = vmatpush1.msra.mxu0 0.0
        %1350 = vmatprep.subr.mxu0 0.0
        %1351 = vmatpush1.msra.mxu0 0.0
        %1352 = vmatprep.subr.mxu0 0.0
        %1353 = vmatpush1.msra.mxu0 0.0
        %1354 = vmatprep.subr.mxu0 0.0
        %1355 = vmatpush1.msra.mxu0 0.0
        %1356 = vmatprep.subr.mxu0 0.0
        %1357 = vmatpush1.msra.mxu0 0.0
        %1358 = vmatprep.subr.mxu0 0.0
        %1359 = vmatpush1.msra.mxu0 0.0
        %1360 = vmatprep.subr.mxu0 0.0
        %1361 = vmatpush1.msra.mxu0 0.0
        %1362 = vmatprep.subr.mxu0 0.0
        %1363 = vmatpush1.msra.mxu0 0.0
        %1364 = vmatprep.subr.mxu0 0.0
        %1365 = vmatpush1.msra.mxu0 0.0
        %1366 = vmatprep.subr.mxu0 0.0
        %1367 = vmatpush1.msra.mxu0 0.0
        %1368 = vmatprep.subr.mxu0 0.0
        %1369 = vmatpush1.msra.mxu0 0.0
        %1370 = vmatprep.subr.mxu0 0.0
        %1371 = vmatpush1.msra.mxu0 0.0
        %1372 = vmatprep.subr.mxu0 0.0
        %1373 = vmatpush1.msra.mxu0 0.0
        %1374 = vmatprep.subr.mxu0 0.0
        %1375 = vmatpush1.msra.mxu0 0.0
        %1376 = vmatprep.subr.mxu0 0.0
        %1377 = vmatpush1.msra.mxu0 0.0
        %1378 = vmatprep.mubr.f32.mxu0 0.0
        %v1379 = vand.u32 %v293, 4294901760
        %v1380 = vsub.f32 %v293, %v1379
        %v1381 = vand.u32 %v1380, 4294901760
        %1382 = vmatmul.mubr.f32.gmra.mrb[0].mxu0 %v1381
        %v1383 = vpop.f32.mrb[0].mxu0
        %v1384 = vadd.f32 %v1295, %v1383
        %v1385 = vpop.f32.mrb[0].mxu0
        %1386 = vdwg.mxu0
        %1387 = vmatprep.subr.mxu0 0.0
        %v1388 = vand.u32 %v294, 4294901760
        %v1389 = vsub.f32 %v294, %v1388
        %v1390 = vand.u32 %v1389, 4294901760
        %1391 = vmatpush1.msra.mxu0 %v1390
        %1392 = vmatprep.subr.mxu0 0.0
        %v1393 = vand.u32 %v295, 4294901760
        %v1394 = vsub.f32 %v295, %v1393
        %v1395 = vand.u32 %v1394, 4294901760
        %1396 = vmatpush1.msra.mxu0 %v1395
        %1397 = vmatprep.subr.mxu0 0.0
        %v1398 = vand.u32 %v296, 4294901760
        %v1399 = vsub.f32 %v296, %v1398
        %v1400 = vand.u32 %v1399, 4294901760
        %1401 = vmatpush1.msra.mxu0 %v1400
        %1402 = vmatprep.subr.mxu0 0.0
        %v1403 = vand.u32 %v297, 4294901760
        %v1404 = vsub.f32 %v297, %v1403
        %v1405 = vand.u32 %v1404, 4294901760
        %1406 = vmatpush1.msra.mxu0 %v1405
        %1407 = vmatprep.subr.mxu0 0.0
        %v1408 = vand.u32 %v298, 4294901760
        %v1409 = vsub.f32 %v298, %v1408
        %v1410 = vand.u32 %v1409, 4294901760
        %1411 = vmatpush1.msra.mxu0 %v1410
        %1412 = vmatprep.subr.mxu0 0.0
        %v1413 = vand.u32 %v299, 4294901760
        %v1414 = vsub.f32 %v299, %v1413
        %v1415 = vand.u32 %v1414, 4294901760
        %1416 = vmatpush1.msra.mxu0 %v1415
        %1417 = vmatprep.subr.mxu0 0.0
        %v1418 = vand.u32 %v300, 4294901760
        %v1419 = vsub.f32 %v300, %v1418
        %v1420 = vand.u32 %v1419, 4294901760
        %1421 = vmatpush1.msra.mxu0 %v1420
        %1422 = vmatprep.subr.mxu0 0.0
        %v1423 = vand.u32 %v301, 4294901760
        %v1424 = vsub.f32 %v301, %v1423
        %v1425 = vand.u32 %v1424, 4294901760
        %1426 = vmatpush1.msra.mxu0 %v1425
        %1427 = vmatprep.subr.mxu0 0.0
        %v1428 = vand.u32 %v302, 4294901760
        %v1429 = vsub.f32 %v302, %v1428
        %v1430 = vand.u32 %v1429, 4294901760
        %1431 = vmatpush1.msra.mxu0 %v1430
        %1432 = vmatprep.subr.mxu0 0.0
        %v1433 = vand.u32 %v303, 4294901760
        %v1434 = vsub.f32 %v303, %v1433
        %v1435 = vand.u32 %v1434, 4294901760
        %1436 = vmatpush1.msra.mxu0 %v1435
        %1437 = vmatprep.subr.mxu0 0.0
        %v1438 = vand.u32 %v304, 4294901760
        %v1439 = vsub.f32 %v304, %v1438
        %v1440 = vand.u32 %v1439, 4294901760
        %1441 = vmatpush1.msra.mxu0 %v1440
        %1442 = vmatprep.subr.mxu0 0.0
        %v1443 = vand.u32 %v305, 4294901760
        %v1444 = vsub.f32 %v305, %v1443
        %v1445 = vand.u32 %v1444, 4294901760
        %1446 = vmatpush1.msra.mxu0 %v1445
        %1447 = vmatprep.subr.mxu0 0.0
        %v1448 = vand.u32 %v306, 4294901760
        %v1449 = vsub.f32 %v306, %v1448
        %v1450 = vand.u32 %v1449, 4294901760
        %1451 = vmatpush1.msra.mxu0 %v1450
        %1452 = vmatprep.subr.mxu0 0.0
        %v1453 = vand.u32 %v307, 4294901760
        %v1454 = vsub.f32 %v307, %v1453
        %v1455 = vand.u32 %v1454, 4294901760
        %1456 = vmatpush1.msra.mxu0 %v1455
        %1457 = vmatprep.subr.mxu0 0.0
        %v1458 = vand.u32 %v308, 4294901760
        %v1459 = vsub.f32 %v308, %v1458
        %v1460 = vand.u32 %v1459, 4294901760
        %1461 = vmatpush1.msra.mxu0 %v1460
        %1462 = vmatprep.subr.mxu0 0.0
        %v1463 = vand.u32 %v309, 4294901760
        %v1464 = vsub.f32 %v309, %v1463
        %v1465 = vand.u32 %v1464, 4294901760
        %1466 = vmatpush1.msra.mxu0 %v1465
        %1467 = vmatprep.subr.mxu0 0.0
        %1468 = vmatpush1.msra.mxu0 0.0
        %1469 = vmatprep.subr.mxu0 0.0
        %1470 = vmatpush1.msra.mxu0 0.0
        %1471 = vmatprep.subr.mxu0 0.0
        %1472 = vmatpush1.msra.mxu0 0.0
        %1473 = vmatprep.subr.mxu0 0.0
        %1474 = vmatpush1.msra.mxu0 0.0
        %1475 = vmatprep.subr.mxu0 0.0
        %1476 = vmatpush1.msra.mxu0 0.0
        %1477 = vmatprep.subr.mxu0 0.0
        %1478 = vmatpush1.msra.mxu0 0.0
        %1479 = vmatprep.subr.mxu0 0.0
        %1480 = vmatpush1.msra.mxu0 0.0
        %1481 = vmatprep.subr.mxu0 0.0
        %1482 = vmatpush1.msra.mxu0 0.0
        %1483 = vmatprep.subr.mxu0 0.0
        %1484 = vmatpush1.msra.mxu0 0.0
        %1485 = vmatprep.subr.mxu0 0.0
        %1486 = vmatpush1.msra.mxu0 0.0
        %1487 = vmatprep.subr.mxu0 0.0
        %1488 = vmatpush1.msra.mxu0 0.0
        %1489 = vmatprep.subr.mxu0 0.0
        %1490 = vmatpush1.msra.mxu0 0.0
        %1491 = vmatprep.subr.mxu0 0.0
        %1492 = vmatpush1.msra.mxu0 0.0
        %1493 = vmatprep.subr.mxu0 0.0
        %1494 = vmatpush1.msra.mxu0 0.0
        %1495 = vmatprep.subr.mxu0 0.0
        %1496 = vmatpush1.msra.mxu0 0.0
        %1497 = vmatprep.subr.mxu0 0.0
        %1498 = vmatpush1.msra.mxu0 0.0
        %1499 = vmatprep.mubr.f32.mxu0 0.0
        %v1500 = vand.u32 %v293, 4294901760
        %1501 = vmatmul.mubr.f32.gmra.mrb[0].mxu0 %v1500
        %v1502 = vpop.f32.mrb[0].mxu0
        %v1503 = vadd.f32 %v1384, %v1502
        %v1504 = vpop.f32.mrb[0].mxu0
        %1505 = vdwg.mxu0
        %1506 = vmatprep.subr.mxu0 0.0
        %v1507 = vand.u32 %v294, 4294901760
        %1508 = vmatpush1.msra.mxu0 %v1507
        %1509 = vmatprep.subr.mxu0 0.0
        %v1510 = vand.u32 %v295, 4294901760
        %1511 = vmatpush1.msra.mxu0 %v1510
        %1512 = vmatprep.subr.mxu0 0.0
        %v1513 = vand.u32 %v296, 4294901760
        %1514 = vmatpush1.msra.mxu0 %v1513
        %1515 = vmatprep.subr.mxu0 0.0
        %v1516 = vand.u32 %v297, 4294901760
        %1517 = vmatpush1.msra.mxu0 %v1516
        %1518 = vmatprep.subr.mxu0 0.0
        %v1519 = vand.u32 %v298, 4294901760
        %1520 = vmatpush1.msra.mxu0 %v1519
        %1521 = vmatprep.subr.mxu0 0.0
        %v1522 = vand.u32 %v299, 4294901760
        %1523 = vmatpush1.msra.mxu0 %v1522
        %1524 = vmatprep.subr.mxu0 0.0
        %v1525 = vand.u32 %v300, 4294901760
        %1526 = vmatpush1.msra.mxu0 %v1525
        %1527 = vmatprep.subr.mxu0 0.0
        %v1528 = vand.u32 %v301, 4294901760
        %1529 = vmatpush1.msra.mxu0 %v1528
        %1530 = vmatprep.subr.mxu0 0.0
        %v1531 = vand.u32 %v302, 4294901760
        %1532 = vmatpush1.msra.mxu0 %v1531
        %1533 = vmatprep.subr.mxu0 0.0
        %v1534 = vand.u32 %v303, 4294901760
        %1535 = vmatpush1.msra.mxu0 %v1534
        %1536 = vmatprep.subr.mxu0 0.0
        %v1537 = vand.u32 %v304, 4294901760
        %1538 = vmatpush1.msra.mxu0 %v1537
        %1539 = vmatprep.subr.mxu0 0.0
        %v1540 = vand.u32 %v305, 4294901760
        %1541 = vmatpush1.msra.mxu0 %v1540
        %1542 = vmatprep.subr.mxu0 0.0
        %v1543 = vand.u32 %v306, 4294901760
        %1544 = vmatpush1.msra.mxu0 %v1543
        %1545 = vmatprep.subr.mxu0 0.0
        %v1546 = vand.u32 %v307, 4294901760
        %1547 = vmatpush1.msra.mxu0 %v1546
        %1548 = vmatprep.subr.mxu0 0.0
        %v1549 = vand.u32 %v308, 4294901760
        %1550 = vmatpush1.msra.mxu0 %v1549
        %1551 = vmatprep.subr.mxu0 0.0
        %v1552 = vand.u32 %v309, 4294901760
        %1553 = vmatpush1.msra.mxu0 %v1552
        %1554 = vmatprep.subr.mxu0 0.0
        %1555 = vmatpush1.msra.mxu0 0.0
        %1556 = vmatprep.subr.mxu0 0.0
        %1557 = vmatpush1.msra.mxu0 0.0
        %1558 = vmatprep.subr.mxu0 0.0
        %1559 = vmatpush1.msra.mxu0 0.0
        %1560 = vmatprep.subr.mxu0 0.0
        %1561 = vmatpush1.msra.mxu0 0.0
        %1562 = vmatprep.subr.mxu0 0.0
        %1563 = vmatpush1.msra.mxu0 0.0
        %1564 = vmatprep.subr.mxu0 0.0
        %1565 = vmatpush1.msra.mxu0 0.0
        %1566 = vmatprep.subr.mxu0 0.0
        %1567 = vmatpush1.msra.mxu0 0.0
        %1568 = vmatprep.subr.mxu0 0.0
        %1569 = vmatpush1.msra.mxu0 0.0
        %1570 = vmatprep.subr.mxu0 0.0
        %1571 = vmatpush1.msra.mxu0 0.0
        %1572 = vmatprep.subr.mxu0 0.0
        %1573 = vmatpush1.msra.mxu0 0.0
        %1574 = vmatprep.subr.mxu0 0.0
        %1575 = vmatpush1.msra.mxu0 0.0
        %1576 = vmatprep.subr.mxu0 0.0
        %1577 = vmatpush1.msra.mxu0 0.0
        %1578 = vmatprep.subr.mxu0 0.0
        %1579 = vmatpush1.msra.mxu0 0.0
        %1580 = vmatprep.subr.mxu0 0.0
        %1581 = vmatpush1.msra.mxu0 0.0
        %1582 = vmatprep.subr.mxu0 0.0
        %1583 = vmatpush1.msra.mxu0 0.0
        %1584 = vmatprep.subr.mxu0 0.0
        %1585 = vmatpush1.msra.mxu0 0.0
        %1586 = vmatprep.mubr.f32.mxu0 0.0
        %v1587 = vand.u32 %v293, 4294901760
        %1588 = vmatmul.mubr.f32.gmra.mrb[0].mxu0 %v1587
        %v1589 = vpop.f32.mrb[0].mxu0
        %v1590 = vadd.f32 %v1503, %v1589
        %v1591 = vpop.f32.mrb[0].mxu0
        %1592 = vdwg.mxu0
        %v1593 = vmul.f32 %v949, 0.015625
        %v1594 = vmul.f32 %v1590, 0.015625
        %v1595 = vmul.f32 %v1593, %v1593
        %v1596 = vsub.f32 %v1594, %v1595
        %v1597 = vmax.f32 %v1596, 0.0
        %v1598 = vadd.f32 %v1597, 1e-05
        %v1599 = vrsqrt.pop %v1598
        %vm1600 = vcmask 31744
        %v1602 = vsel %vm1600, %v1593, 0
        %vm1604 = vcmask 1043456
        %v1606 = vsel %vm1604, %v310, 0
        %1608 = vmatprep.subr.mxu0 0.0
        %v1609 = vand.u32 %v1606, 4294901760
        %1610 = vmatpush1.msra.mxu0 %v1609
        %1611 = vmatprep.subr.mxu0 0.0
        %1612 = vmatpush1.msra.mxu0 0.0
        %1613 = vmatprep.subr.mxu0 0.0
        %1614 = vmatpush1.msra.mxu0 0.0
        %1615 = vmatprep.subr.mxu0 0.0
        %1616 = vmatpush1.msra.mxu0 0.0
        %1617 = vmatprep.subr.mxu0 0.0
        %1618 = vmatpush1.msra.mxu0 0.0
        %1619 = vmatprep.subr.mxu0 0.0
        %1620 = vmatpush1.msra.mxu0 0.0
        %1621 = vmatprep.subr.mxu0 0.0
        %1622 = vmatpush1.msra.mxu0 0.0
        %1623 = vmatprep.subr.mxu0 0.0
        %1624 = vmatpush1.msra.mxu0 0.0
        %1625 = vmatprep.subr.mxu0 0.0
        %1626 = vmatpush1.msra.mxu0 0.0
        %1627 = vmatprep.subr.mxu0 0.0
        %1628 = vmatpush1.msra.mxu0 0.0
        %1629 = vmatprep.subr.mxu0 0.0
        %1630 = vmatpush1.msra.mxu0 0.0
        %1631 = vmatprep.subr.mxu0 0.0
        %1632 = vmatpush1.msra.mxu0 0.0
        %1633 = vmatprep.subr.mxu0 0.0
        %1634 = vmatpush1.msra.mxu0 0.0
        %1635 = vmatprep.subr.mxu0 0.0
        %1636 = vmatpush1.msra.mxu0 0.0
        %1637 = vmatprep.subr.mxu0 0.0
        %1638 = vmatpush1.msra.mxu0 0.0
        %1639 = vmatprep.subr.mxu0 0.0
        %1640 = vmatpush1.msra.mxu0 0.0
        %1641 = vmatprep.subr.mxu0 0.0
        %1642 = vmatpush1.msra.mxu0 0.0
        %1643 = vmatprep.subr.mxu0 0.0
        %1644 = vmatpush1.msra.mxu0 0.0
        %1645 = vmatprep.subr.mxu0 0.0
        %1646 = vmatpush1.msra.mxu0 0.0
        %1647 = vmatprep.subr.mxu0 0.0
        %1648 = vmatpush1.msra.mxu0 0.0
        %1649 = vmatprep.subr.mxu0 0.0
        %1650 = vmatpush1.msra.mxu0 0.0
        %1651 = vmatprep.subr.mxu0 0.0
        %1652 = vmatpush1.msra.mxu0 0.0
        %1653 = vmatprep.subr.mxu0 0.0
        %1654 = vmatpush1.msra.mxu0 0.0
        %1655 = vmatprep.subr.mxu0 0.0
        %1656 = vmatpush1.msra.mxu0 0.0
        %1657 = vmatprep.subr.mxu0 0.0
        %1658 = vmatpush1.msra.mxu0 0.0
        %1659 = vmatprep.subr.mxu0 0.0
        %1660 = vmatpush1.msra.mxu0 0.0
        %1661 = vmatprep.subr.mxu0 0.0
        %1662 = vmatpush1.msra.mxu0 0.0
        %1663 = vmatprep.subr.mxu0 0.0
        %1664 = vmatpush1.msra.mxu0 0.0
        %1665 = vmatprep.subr.mxu0 0.0
        %1666 = vmatpush1.msra.mxu0 0.0
        %1667 = vmatprep.subr.mxu0 0.0
        %1668 = vmatpush1.msra.mxu0 0.0
        %1669 = vmatprep.subr.mxu0 0.0
        %1670 = vmatpush1.msra.mxu0 0.0
        %1671 = vmatprep.subr.mxu0 0.0
        %1672 = vmatpush1.msra.mxu0 0.0
        %1673 = vmatprep.mubr.f32.mxu0 0.0
        %v1674 = vand.u32 %v1602, 4294901760
        %v1675 = vsub.f32 %v1602, %v1674
        %v1676 = vand.u32 %v1675, 4294901760
        %v1677 = vsub.f32 %v1675, %v1676
        %v1678 = vand.u32 %v1677, 4294901760
        %1679 = vmatmul.mubr.f32.gmra.mrb[0].mxu0 %v1678
        %v1680 = vpop.f32.mrb[0].mxu0
        %v1681 = vadd.f32 0.0, %v1680
        %v1682 = vpop.f32.mrb[0].mxu0
        %1683 = vdwg.mxu0
        %1684 = vmatprep.subr.mxu0 0.0
        %v1685 = vand.u32 %v1606, 4294901760
        %v1686 = vsub.f32 %v1606, %v1685
        %v1687 = vand.u32 %v1686, 4294901760
        %v1688 = vsub.f32 %v1686, %v1687
        %v1689 = vand.u32 %v1688, 4294901760
        %1690 = vmatpush1.msra.mxu0 %v1689
        %1691 = vmatprep.subr.mxu0 0.0
        %1692 = vmatpush1.msra.mxu0 0.0
        %1693 = vmatprep.subr.mxu0 0.0
        %1694 = vmatpush1.msra.mxu0 0.0
        %1695 = vmatprep.subr.mxu0 0.0
        %1696 = vmatpush1.msra.mxu0 0.0
        %1697 = vmatprep.subr.mxu0 0.0
        %1698 = vmatpush1.msra.mxu0 0.0
        %1699 = vmatprep.subr.mxu0 0.0
        %1700 = vmatpush1.msra.mxu0 0.0
        %1701 = vmatprep.subr.mxu0 0.0
        %1702 = vmatpush1.msra.mxu0 0.0
        %1703 = vmatprep.subr.mxu0 0.0
        %1704 = vmatpush1.msra.mxu0 0.0
        %1705 = vmatprep.subr.mxu0 0.0
        %1706 = vmatpush1.msra.mxu0 0.0
        %1707 = vmatprep.subr.mxu0 0.0
        %1708 = vmatpush1.msra.mxu0 0.0
        %1709 = vmatprep.subr.mxu0 0.0
        %1710 = vmatpush1.msra.mxu0 0.0
        %1711 = vmatprep.subr.mxu0 0.0
        %1712 = vmatpush1.msra.mxu0 0.0
        %1713 = vmatprep.subr.mxu0 0.0
        %1714 = vmatpush1.msra.mxu0 0.0
        %1715 = vmatprep.subr.mxu0 0.0
        %1716 = vmatpush1.msra.mxu0 0.0
        %1717 = vmatprep.subr.mxu0 0.0
        %1718 = vmatpush1.msra.mxu0 0.0
        %1719 = vmatprep.subr.mxu0 0.0
        %1720 = vmatpush1.msra.mxu0 0.0
        %1721 = vmatprep.subr.mxu0 0.0
        %1722 = vmatpush1.msra.mxu0 0.0
        %1723 = vmatprep.subr.mxu0 0.0
        %1724 = vmatpush1.msra.mxu0 0.0
        %1725 = vmatprep.subr.mxu0 0.0
        %1726 = vmatpush1.msra.mxu0 0.0
        %1727 = vmatprep.subr.mxu0 0.0
        %1728 = vmatpush1.msra.mxu0 0.0
        %1729 = vmatprep.subr.mxu0 0.0
        %1730 = vmatpush1.msra.mxu0 0.0
        %1731 = vmatprep.subr.mxu0 0.0
        %1732 = vmatpush1.msra.mxu0 0.0
        %1733 = vmatprep.subr.mxu0 0.0
        %1734 = vmatpush1.msra.mxu0 0.0
        %1735 = vmatprep.subr.mxu0 0.0
        %1736 = vmatpush1.msra.mxu0 0.0
        %1737 = vmatprep.subr.mxu0 0.0
        %1738 = vmatpush1.msra.mxu0 0.0
        %1739 = vmatprep.subr.mxu0 0.0
        %1740 = vmatpush1.msra.mxu0 0.0
        %1741 = vmatprep.subr.mxu0 0.0
        %1742 = vmatpush1.msra.mxu0 0.0
        %1743 = vmatprep.subr.mxu0 0.0
        %1744 = vmatpush1.msra.mxu0 0.0
        %1745 = vmatprep.subr.mxu0 0.0
        %1746 = vmatpush1.msra.mxu0 0.0
        %1747 = vmatprep.subr.mxu0 0.0
        %1748 = vmatpush1.msra.mxu0 0.0
        %1749 = vmatprep.subr.mxu0 0.0
        %1750 = vmatpush1.msra.mxu0 0.0
        %1751 = vmatprep.subr.mxu0 0.0
        %1752 = vmatpush1.msra.mxu0 0.0
        %1753 = vmatprep.mubr.f32.mxu0 0.0
        %v1754 = vand.u32 %v1602, 4294901760
        %1755 = vmatmul.mubr.f32.gmra.mrb[0].mxu0 %v1754
        %v1756 = vpop.f32.mrb[0].mxu0
        %v1757 = vadd.f32 %v1681, %v1756
        %v1758 = vpop.f32.mrb[0].mxu0
        %1759 = vdwg.mxu0
        %1760 = vmatprep.subr.mxu0 0.0
        %v1761 = vand.u32 %v1606, 4294901760
        %v1762 = vsub.f32 %v1606, %v1761
        %1763 = vmatpush1.msra.mxu0 %v1762
        %1764 = vmatprep.subr.mxu0 0.0
        %1765 = vmatpush1.msra.mxu0 0.0
        %1766 = vmatprep.subr.mxu0 0.0
        %1767 = vmatpush1.msra.mxu0 0.0
        %1768 = vmatprep.subr.mxu0 0.0
        %1769 = vmatpush1.msra.mxu0 0.0
        %1770 = vmatprep.subr.mxu0 0.0
        %1771 = vmatpush1.msra.mxu0 0.0
        %1772 = vmatprep.subr.mxu0 0.0
        %1773 = vmatpush1.msra.mxu0 0.0
        %1774 = vmatprep.subr.mxu0 0.0
        %1775 = vmatpush1.msra.mxu0 0.0
        %1776 = vmatprep.subr.mxu0 0.0
        %1777 = vmatpush1.msra.mxu0 0.0
        %1778 = vmatprep.subr.mxu0 0.0
        %1779 = vmatpush1.msra.mxu0 0.0
        %1780 = vmatprep.subr.mxu0 0.0
        %1781 = vmatpush1.msra.mxu0 0.0
        %1782 = vmatprep.subr.mxu0 0.0
        %1783 = vmatpush1.msra.mxu0 0.0
        %1784 = vmatprep.subr.mxu0 0.0
        %1785 = vmatpush1.msra.mxu0 0.0
        %1786 = vmatprep.subr.mxu0 0.0
        %1787 = vmatpush1.msra.mxu0 0.0
        %1788 = vmatprep.subr.mxu0 0.0
        %1789 = vmatpush1.msra.mxu0 0.0
        %1790 = vmatprep.subr.mxu0 0.0
        %1791 = vmatpush1.msra.mxu0 0.0
        %1792 = vmatprep.subr.mxu0 0.0
        %1793 = vmatpush1.msra.mxu0 0.0
        %1794 = vmatprep.subr.mxu0 0.0
        %1795 = vmatpush1.msra.mxu0 0.0
        %1796 = vmatprep.subr.mxu0 0.0
        %1797 = vmatpush1.msra.mxu0 0.0
        %1798 = vmatprep.subr.mxu0 0.0
        %1799 = vmatpush1.msra.mxu0 0.0
        %1800 = vmatprep.subr.mxu0 0.0
        %1801 = vmatpush1.msra.mxu0 0.0
        %1802 = vmatprep.subr.mxu0 0.0
        %1803 = vmatpush1.msra.mxu0 0.0
        %1804 = vmatprep.subr.mxu0 0.0
        %1805 = vmatpush1.msra.mxu0 0.0
        %1806 = vmatprep.subr.mxu0 0.0
        %1807 = vmatpush1.msra.mxu0 0.0
        %1808 = vmatprep.subr.mxu0 0.0
        %1809 = vmatpush1.msra.mxu0 0.0
        %1810 = vmatprep.subr.mxu0 0.0
        %1811 = vmatpush1.msra.mxu0 0.0
        %1812 = vmatprep.subr.mxu0 0.0
        %1813 = vmatpush1.msra.mxu0 0.0
        %1814 = vmatprep.subr.mxu0 0.0
        %1815 = vmatpush1.msra.mxu0 0.0
        %1816 = vmatprep.subr.mxu0 0.0
        %1817 = vmatpush1.msra.mxu0 0.0
        %1818 = vmatprep.subr.mxu0 0.0
        %1819 = vmatpush1.msra.mxu0 0.0
        %1820 = vmatprep.subr.mxu0 0.0
        %1821 = vmatpush1.msra.mxu0 0.0
        %1822 = vmatprep.subr.mxu0 0.0
        %1823 = vmatpush1.msra.mxu0 0.0
        %1824 = vmatprep.subr.mxu0 0.0
        %1825 = vmatpush1.msra.mxu0 0.0
        %1826 = vmatprep.mubr.f32.mxu0 0.0
        %v1827 = vand.u32 %v1602, 4294901760
        %v1828 = vsub.f32 %v1602, %v1827
        %1829 = vmatmul.mubr.f32.gmra.mrb[0].mxu0 %v1828
        %v1830 = vpop.f32.mrb[0].mxu0
        %v1831 = vadd.f32 %v1757, %v1830
        %v1832 = vpop.f32.mrb[0].mxu0
        %1833 = vdwg.mxu0
        %1834 = vmatprep.subr.mxu0 0.0
        %v1835 = vand.u32 %v1606, 4294901760
        %1836 = vmatpush1.msra.mxu0 %v1835
        %1837 = vmatprep.subr.mxu0 0.0
        %1838 = vmatpush1.msra.mxu0 0.0
        %1839 = vmatprep.subr.mxu0 0.0
        %1840 = vmatpush1.msra.mxu0 0.0
        %1841 = vmatprep.subr.mxu0 0.0
        %1842 = vmatpush1.msra.mxu0 0.0
        %1843 = vmatprep.subr.mxu0 0.0
        %1844 = vmatpush1.msra.mxu0 0.0
        %1845 = vmatprep.subr.mxu0 0.0
        %1846 = vmatpush1.msra.mxu0 0.0
        %1847 = vmatprep.subr.mxu0 0.0
        %1848 = vmatpush1.msra.mxu0 0.0
        %1849 = vmatprep.subr.mxu0 0.0
        %1850 = vmatpush1.msra.mxu0 0.0
        %1851 = vmatprep.subr.mxu0 0.0
        %1852 = vmatpush1.msra.mxu0 0.0
        %1853 = vmatprep.subr.mxu0 0.0
        %1854 = vmatpush1.msra.mxu0 0.0
        %1855 = vmatprep.subr.mxu0 0.0
        %1856 = vmatpush1.msra.mxu0 0.0
        %1857 = vmatprep.subr.mxu0 0.0
        %1858 = vmatpush1.msra.mxu0 0.0
        %1859 = vmatprep.subr.mxu0 0.0
        %1860 = vmatpush1.msra.mxu0 0.0
        %1861 = vmatprep.subr.mxu0 0.0
        %1862 = vmatpush1.msra.mxu0 0.0
        %1863 = vmatprep.subr.mxu0 0.0
        %1864 = vmatpush1.msra.mxu0 0.0
        %1865 = vmatprep.subr.mxu0 0.0
        %1866 = vmatpush1.msra.mxu0 0.0
        %1867 = vmatprep.subr.mxu0 0.0
        %1868 = vmatpush1.msra.mxu0 0.0
        %1869 = vmatprep.subr.mxu0 0.0
        %1870 = vmatpush1.msra.mxu0 0.0
        %1871 = vmatprep.subr.mxu0 0.0
        %1872 = vmatpush1.msra.mxu0 0.0
        %1873 = vmatprep.subr.mxu0 0.0
        %1874 = vmatpush1.msra.mxu0 0.0
        %1875 = vmatprep.subr.mxu0 0.0
        %1876 = vmatpush1.msra.mxu0 0.0
        %1877 = vmatprep.subr.mxu0 0.0
        %1878 = vmatpush1.msra.mxu0 0.0
        %1879 = vmatprep.subr.mxu0 0.0
        %1880 = vmatpush1.msra.mxu0 0.0
        %1881 = vmatprep.subr.mxu0 0.0
        %1882 = vmatpush1.msra.mxu0 0.0
        %1883 = vmatprep.subr.mxu0 0.0
        %1884 = vmatpush1.msra.mxu0 0.0
        %1885 = vmatprep.subr.mxu0 0.0
        %1886 = vmatpush1.msra.mxu0 0.0
        %1887 = vmatprep.subr.mxu0 0.0
        %1888 = vmatpush1.msra.mxu0 0.0
        %1889 = vmatprep.subr.mxu0 0.0
        %1890 = vmatpush1.msra.mxu0 0.0
        %1891 = vmatprep.subr.mxu0 0.0
        %1892 = vmatpush1.msra.mxu0 0.0
        %1893 = vmatprep.subr.mxu0 0.0
        %1894 = vmatpush1.msra.mxu0 0.0
        %1895 = vmatprep.subr.mxu0 0.0
        %1896 = vmatpush1.msra.mxu0 0.0
        %1897 = vmatprep.subr.mxu0 0.0
        %1898 = vmatpush1.msra.mxu0 0.0
        %1899 = vmatprep.mubr.f32.mxu0 0.0
        %v1900 = vand.u32 %v1602, 4294901760
        %v1901 = vsub.f32 %v1602, %v1900
        %v1902 = vand.u32 %v1901, 4294901760
        %1903 = vmatmul.mubr.f32.gmra.mrb[0].mxu0 %v1902
        %v1904 = vpop.f32.mrb[0].mxu0
        %v1905 = vadd.f32 %v1831, %v1904
        %v1906 = vpop.f32.mrb[0].mxu0
        %1907 = vdwg.mxu0
        %1908 = vmatprep.subr.mxu0 0.0
        %v1909 = vand.u32 %v1606, 4294901760
        %v1910 = vsub.f32 %v1606, %v1909
        %v1911 = vand.u32 %v1910, 4294901760
        %1912 = vmatpush1.msra.mxu0 %v1911
        %1913 = vmatprep.subr.mxu0 0.0
        %1914 = vmatpush1.msra.mxu0 0.0
        %1915 = vmatprep.subr.mxu0 0.0
        %1916 = vmatpush1.msra.mxu0 0.0
        %1917 = vmatprep.subr.mxu0 0.0
        %1918 = vmatpush1.msra.mxu0 0.0
        %1919 = vmatprep.subr.mxu0 0.0
        %1920 = vmatpush1.msra.mxu0 0.0
        %1921 = vmatprep.subr.mxu0 0.0
        %1922 = vmatpush1.msra.mxu0 0.0
        %1923 = vmatprep.subr.mxu0 0.0
        %1924 = vmatpush1.msra.mxu0 0.0
        %1925 = vmatprep.subr.mxu0 0.0
        %1926 = vmatpush1.msra.mxu0 0.0
        %1927 = vmatprep.subr.mxu0 0.0
        %1928 = vmatpush1.msra.mxu0 0.0
        %1929 = vmatprep.subr.mxu0 0.0
        %1930 = vmatpush1.msra.mxu0 0.0
        %1931 = vmatprep.subr.mxu0 0.0
        %1932 = vmatpush1.msra.mxu0 0.0
        %1933 = vmatprep.subr.mxu0 0.0
        %1934 = vmatpush1.msra.mxu0 0.0
        %1935 = vmatprep.subr.mxu0 0.0
        %1936 = vmatpush1.msra.mxu0 0.0
        %1937 = vmatprep.subr.mxu0 0.0
        %1938 = vmatpush1.msra.mxu0 0.0
        %1939 = vmatprep.subr.mxu0 0.0
        %1940 = vmatpush1.msra.mxu0 0.0
        %1941 = vmatprep.subr.mxu0 0.0
        %1942 = vmatpush1.msra.mxu0 0.0
        %1943 = vmatprep.subr.mxu0 0.0
        %1944 = vmatpush1.msra.mxu0 0.0
        %1945 = vmatprep.subr.mxu0 0.0
        %1946 = vmatpush1.msra.mxu0 0.0
        %1947 = vmatprep.subr.mxu0 0.0
        %1948 = vmatpush1.msra.mxu0 0.0
        %1949 = vmatprep.subr.mxu0 0.0
        %1950 = vmatpush1.msra.mxu0 0.0
        %1951 = vmatprep.subr.mxu0 0.0
        %1952 = vmatpush1.msra.mxu0 0.0
        %1953 = vmatprep.subr.mxu0 0.0
        %1954 = vmatpush1.msra.mxu0 0.0
        %1955 = vmatprep.subr.mxu0 0.0
        %1956 = vmatpush1.msra.mxu0 0.0
        %1957 = vmatprep.subr.mxu0 0.0
        %1958 = vmatpush1.msra.mxu0 0.0
        %1959 = vmatprep.subr.mxu0 0.0
        %1960 = vmatpush1.msra.mxu0 0.0
        %1961 = vmatprep.subr.mxu0 0.0
        %1962 = vmatpush1.msra.mxu0 0.0
        %1963 = vmatprep.subr.mxu0 0.0
        %1964 = vmatpush1.msra.mxu0 0.0
        %1965 = vmatprep.subr.mxu0 0.0
        %1966 = vmatpush1.msra.mxu0 0.0
        %1967 = vmatprep.subr.mxu0 0.0
        %1968 = vmatpush1.msra.mxu0 0.0
        %1969 = vmatprep.subr.mxu0 0.0
        %1970 = vmatpush1.msra.mxu0 0.0
        %1971 = vmatprep.subr.mxu0 0.0
        %1972 = vmatpush1.msra.mxu0 0.0
        %1973 = vmatprep.subr.mxu0 0.0
        %1974 = vmatpush1.msra.mxu0 0.0
        %1975 = vmatprep.mubr.f32.mxu0 0.0
        %v1976 = vand.u32 %v1602, 4294901760
        %1977 = vmatmul.mubr.f32.gmra.mrb[0].mxu0 %v1976
        %v1978 = vpop.f32.mrb[0].mxu0
        %v1979 = vadd.f32 %v1905, %v1978
        %v1980 = vpop.f32.mrb[0].mxu0
        %1981 = vdwg.mxu0
        %1982 = vmatprep.subr.mxu0 0.0
        %v1983 = vand.u32 %v1606, 4294901760
        %1984 = vmatpush1.msra.mxu0 %v1983
        %1985 = vmatprep.subr.mxu0 0.0
        %1986 = vmatpush1.msra.mxu0 0.0
        %1987 = vmatprep.subr.mxu0 0.0
        %1988 = vmatpush1.msra.mxu0 0.0
        %1989 = vmatprep.subr.mxu0 0.0
        %1990 = vmatpush1.msra.mxu0 0.0
        %1991 = vmatprep.subr.mxu0 0.0
        %1992 = vmatpush1.msra.mxu0 0.0
        %1993 = vmatprep.subr.mxu0 0.0
        %1994 = vmatpush1.msra.mxu0 0.0
        %1995 = vmatprep.subr.mxu0 0.0
        %1996 = vmatpush1.msra.mxu0 0.0
        %1997 = vmatprep.subr.mxu0 0.0
        %1998 = vmatpush1.msra.mxu0 0.0
        %1999 = vmatprep.subr.mxu0 0.0
        %2000 = vmatpush1.msra.mxu0 0.0
        %2001 = vmatprep.subr.mxu0 0.0
        %2002 = vmatpush1.msra.mxu0 0.0
        %2003 = vmatprep.subr.mxu0 0.0
        %2004 = vmatpush1.msra.mxu0 0.0
        %2005 = vmatprep.subr.mxu0 0.0
        %2006 = vmatpush1.msra.mxu0 0.0
        %2007 = vmatprep.subr.mxu0 0.0
        %2008 = vmatpush1.msra.mxu0 0.0
        %2009 = vmatprep.subr.mxu0 0.0
        %2010 = vmatpush1.msra.mxu0 0.0
        %2011 = vmatprep.subr.mxu0 0.0
        %2012 = vmatpush1.msra.mxu0 0.0
        %2013 = vmatprep.subr.mxu0 0.0
        %2014 = vmatpush1.msra.mxu0 0.0
        %2015 = vmatprep.subr.mxu0 0.0
        %2016 = vmatpush1.msra.mxu0 0.0
        %2017 = vmatprep.subr.mxu0 0.0
        %2018 = vmatpush1.msra.mxu0 0.0
        %2019 = vmatprep.subr.mxu0 0.0
        %2020 = vmatpush1.msra.mxu0 0.0
        %2021 = vmatprep.subr.mxu0 0.0
        %2022 = vmatpush1.msra.mxu0 0.0
        %2023 = vmatprep.subr.mxu0 0.0
        %2024 = vmatpush1.msra.mxu0 0.0
        %2025 = vmatprep.subr.mxu0 0.0
        %2026 = vmatpush1.msra.mxu0 0.0
        %2027 = vmatprep.subr.mxu0 0.0
        %2028 = vmatpush1.msra.mxu0 0.0
        %2029 = vmatprep.subr.mxu0 0.0
        %2030 = vmatpush1.msra.mxu0 0.0
        %2031 = vmatprep.subr.mxu0 0.0
        %2032 = vmatpush1.msra.mxu0 0.0
        %2033 = vmatprep.subr.mxu0 0.0
        %2034 = vmatpush1.msra.mxu0 0.0
        %2035 = vmatprep.subr.mxu0 0.0
        %2036 = vmatpush1.msra.mxu0 0.0
        %2037 = vmatprep.subr.mxu0 0.0
        %2038 = vmatpush1.msra.mxu0 0.0
        %2039 = vmatprep.subr.mxu0 0.0
        %2040 = vmatpush1.msra.mxu0 0.0
        %2041 = vmatprep.subr.mxu0 0.0
        %2042 = vmatpush1.msra.mxu0 0.0
        %2043 = vmatprep.subr.mxu0 0.0
        %2044 = vmatpush1.msra.mxu0 0.0
        %2045 = vmatprep.subr.mxu0 0.0
        %2046 = vmatpush1.msra.mxu0 0.0
        %2047 = vmatprep.mubr.f32.mxu0 0.0
        %v2048 = vand.u32 %v1602, 4294901760
        %2049 = vmatmul.mubr.f32.gmra.mrb[0].mxu0 %v2048
        %v2050 = vpop.f32.mrb[0].mxu0
        %v2051 = vadd.f32 %v1979, %v2050
        %v2052 = vpop.f32.mrb[0].mxu0
        %2053 = vdwg.mxu0
        %v2055 = vsel %vm1600, %v1599, 0
        %2057 = vmatprep.subr.mxu0 0.0
        %v2058 = vand.u32 %v1606, 4294901760
        %2059 = vmatpush1.msra.mxu0 %v2058
        %2060 = vmatprep.subr.mxu0 0.0
        %2061 = vmatpush1.msra.mxu0 0.0
        %2062 = vmatprep.subr.mxu0 0.0
        %2063 = vmatpush1.msra.mxu0 0.0
        %2064 = vmatprep.subr.mxu0 0.0
        %2065 = vmatpush1.msra.mxu0 0.0
        %2066 = vmatprep.subr.mxu0 0.0
        %2067 = vmatpush1.msra.mxu0 0.0
        %2068 = vmatprep.subr.mxu0 0.0
        %2069 = vmatpush1.msra.mxu0 0.0
        %2070 = vmatprep.subr.mxu0 0.0
        %2071 = vmatpush1.msra.mxu0 0.0
        %2072 = vmatprep.subr.mxu0 0.0
        %2073 = vmatpush1.msra.mxu0 0.0
        %2074 = vmatprep.subr.mxu0 0.0
        %2075 = vmatpush1.msra.mxu0 0.0
        %2076 = vmatprep.subr.mxu0 0.0
        %2077 = vmatpush1.msra.mxu0 0.0
        %2078 = vmatprep.subr.mxu0 0.0
        %2079 = vmatpush1.msra.mxu0 0.0
        %2080 = vmatprep.subr.mxu0 0.0
        %2081 = vmatpush1.msra.mxu0 0.0
        %2082 = vmatprep.subr.mxu0 0.0
        %2083 = vmatpush1.msra.mxu0 0.0
        %2084 = vmatprep.subr.mxu0 0.0
        %2085 = vmatpush1.msra.mxu0 0.0
        %2086 = vmatprep.subr.mxu0 0.0
        %2087 = vmatpush1.msra.mxu0 0.0
        %2088 = vmatprep.subr.mxu0 0.0
        %2089 = vmatpush1.msra.mxu0 0.0
        %2090 = vmatprep.subr.mxu0 0.0
        %2091 = vmatpush1.msra.mxu0 0.0
        %2092 = vmatprep.subr.mxu0 0.0
        %2093 = vmatpush1.msra.mxu0 0.0
        %2094 = vmatprep.subr.mxu0 0.0
        %2095 = vmatpush1.msra.mxu0 0.0
        %2096 = vmatprep.subr.mxu0 0.0
        %2097 = vmatpush1.msra.mxu0 0.0
        %2098 = vmatprep.subr.mxu0 0.0
        %2099 = vmatpush1.msra.mxu0 0.0
        %2100 = vmatprep.subr.mxu0 0.0
        %2101 = vmatpush1.msra.mxu0 0.0
        %2102 = vmatprep.subr.mxu0 0.0
        %2103 = vmatpush1.msra.mxu0 0.0
        %2104 = vmatprep.subr.mxu0 0.0
        %2105 = vmatpush1.msra.mxu0 0.0
        %2106 = vmatprep.subr.mxu0 0.0
        %2107 = vmatpush1.msra.mxu0 0.0
        %2108 = vmatprep.subr.mxu0 0.0
        %2109 = vmatpush1.msra.mxu0 0.0
        %2110 = vmatprep.subr.mxu0 0.0
        %2111 = vmatpush1.msra.mxu0 0.0
        %2112 = vmatprep.subr.mxu0 0.0
        %2113 = vmatpush1.msra.mxu0 0.0
        %2114 = vmatprep.subr.mxu0 0.0
        %2115 = vmatpush1.msra.mxu0 0.0
        %2116 = vmatprep.subr.mxu0 0.0
        %2117 = vmatpush1.msra.mxu0 0.0
        %2118 = vmatprep.subr.mxu0 0.0
        %2119 = vmatpush1.msra.mxu0 0.0
        %2120 = vmatprep.subr.mxu0 0.0
        %2121 = vmatpush1.msra.mxu0 0.0
        %2122 = vmatprep.mubr.f32.mxu0 0.0
        %v2123 = vand.u32 %v2055, 4294901760
        %v2124 = vsub.f32 %v2055, %v2123
        %v2125 = vand.u32 %v2124, 4294901760
        %v2126 = vsub.f32 %v2124, %v2125
        %v2127 = vand.u32 %v2126, 4294901760
        %2128 = vmatmul.mubr.f32.gmra.mrb[0].mxu0 %v2127
        %v2129 = vpop.f32.mrb[0].mxu0
        %v2130 = vadd.f32 0.0, %v2129
        %v2131 = vpop.f32.mrb[0].mxu0
        %2132 = vdwg.mxu0
        %2133 = vmatprep.subr.mxu0 0.0
        %v2134 = vand.u32 %v1606, 4294901760
        %v2135 = vsub.f32 %v1606, %v2134
        %v2136 = vand.u32 %v2135, 4294901760
        %v2137 = vsub.f32 %v2135, %v2136
        %v2138 = vand.u32 %v2137, 4294901760
        %2139 = vmatpush1.msra.mxu0 %v2138
        %2140 = vmatprep.subr.mxu0 0.0
        %2141 = vmatpush1.msra.mxu0 0.0
        %2142 = vmatprep.subr.mxu0 0.0
        %2143 = vmatpush1.msra.mxu0 0.0
        %2144 = vmatprep.subr.mxu0 0.0
        %2145 = vmatpush1.msra.mxu0 0.0
        %2146 = vmatprep.subr.mxu0 0.0
        %2147 = vmatpush1.msra.mxu0 0.0
        %2148 = vmatprep.subr.mxu0 0.0
        %2149 = vmatpush1.msra.mxu0 0.0
        %2150 = vmatprep.subr.mxu0 0.0
        %2151 = vmatpush1.msra.mxu0 0.0
        %2152 = vmatprep.subr.mxu0 0.0
        %2153 = vmatpush1.msra.mxu0 0.0
        %2154 = vmatprep.subr.mxu0 0.0
        %2155 = vmatpush1.msra.mxu0 0.0
        %2156 = vmatprep.subr.mxu0 0.0
        %2157 = vmatpush1.msra.mxu0 0.0
        %2158 = vmatprep.subr.mxu0 0.0
        %2159 = vmatpush1.msra.mxu0 0.0
        %2160 = vmatprep.subr.mxu0 0.0
        %2161 = vmatpush1.msra.mxu0 0.0
        %2162 = vmatprep.subr.mxu0 0.0
        %2163 = vmatpush1.msra.mxu0 0.0
        %2164 = vmatprep.subr.mxu0 0.0
        %2165 = vmatpush1.msra.mxu0 0.0
        %2166 = vmatprep.subr.mxu0 0.0
        %2167 = vmatpush1.msra.mxu0 0.0
        %2168 = vmatprep.subr.mxu0 0.0
        %2169 = vmatpush1.msra.mxu0 0.0
        %2170 = vmatprep.subr.mxu0 0.0
        %2171 = vmatpush1.msra.mxu0 0.0
        %2172 = vmatprep.subr.mxu0 0.0
        %2173 = vmatpush1.msra.mxu0 0.0
        %2174 = vmatprep.subr.mxu0 0.0
        %2175 = vmatpush1.msra.mxu0 0.0
        %2176 = vmatprep.subr.mxu0 0.0
        %2177 = vmatpush1.msra.mxu0 0.0
        %2178 = vmatprep.subr.mxu0 0.0
        %2179 = vmatpush1.msra.mxu0 0.0
        %2180 = vmatprep.subr.mxu0 0.0
        %2181 = vmatpush1.msra.mxu0 0.0
        %2182 = vmatprep.subr.mxu0 0.0
        %2183 = vmatpush1.msra.mxu0 0.0
        %2184 = vmatprep.subr.mxu0 0.0
        %2185 = vmatpush1.msra.mxu0 0.0
        %2186 = vmatprep.subr.mxu0 0.0
        %2187 = vmatpush1.msra.mxu0 0.0
        %2188 = vmatprep.subr.mxu0 0.0
        %2189 = vmatpush1.msra.mxu0 0.0
        %2190 = vmatprep.subr.mxu0 0.0
        %2191 = vmatpush1.msra.mxu0 0.0
        %2192 = vmatprep.subr.mxu0 0.0
        %2193 = vmatpush1.msra.mxu0 0.0
        %2194 = vmatprep.subr.mxu0 0.0
        %2195 = vmatpush1.msra.mxu0 0.0
        %2196 = vmatprep.subr.mxu0 0.0
        %2197 = vmatpush1.msra.mxu0 0.0
        %2198 = vmatprep.subr.mxu0 0.0
        %2199 = vmatpush1.msra.mxu0 0.0
        %2200 = vmatprep.subr.mxu0 0.0
        %2201 = vmatpush1.msra.mxu0 0.0
        %2202 = vmatprep.mubr.f32.mxu0 0.0
        %v2203 = vand.u32 %v2055, 4294901760
        %2204 = vmatmul.mubr.f32.gmra.mrb[0].mxu0 %v2203
        %v2205 = vpop.f32.mrb[0].mxu0
        %v2206 = vadd.f32 %v2130, %v2205
        %v2207 = vpop.f32.mrb[0].mxu0
        %2208 = vdwg.mxu0
        %2209 = vmatprep.subr.mxu0 0.0
        %v2210 = vand.u32 %v1606, 4294901760
        %v2211 = vsub.f32 %v1606, %v2210
        %2212 = vmatpush1.msra.mxu0 %v2211
        %2213 = vmatprep.subr.mxu0 0.0
        %2214 = vmatpush1.msra.mxu0 0.0
        %2215 = vmatprep.subr.mxu0 0.0
        %2216 = vmatpush1.msra.mxu0 0.0
        %2217 = vmatprep.subr.mxu0 0.0
        %2218 = vmatpush1.msra.mxu0 0.0
        %2219 = vmatprep.subr.mxu0 0.0
        %2220 = vmatpush1.msra.mxu0 0.0
        %2221 = vmatprep.subr.mxu0 0.0
        %2222 = vmatpush1.msra.mxu0 0.0
        %2223 = vmatprep.subr.mxu0 0.0
        %2224 = vmatpush1.msra.mxu0 0.0
        %2225 = vmatprep.subr.mxu0 0.0
        %2226 = vmatpush1.msra.mxu0 0.0
        %2227 = vmatprep.subr.mxu0 0.0
        %2228 = vmatpush1.msra.mxu0 0.0
        %2229 = vmatprep.subr.mxu0 0.0
        %2230 = vmatpush1.msra.mxu0 0.0
        %2231 = vmatprep.subr.mxu0 0.0
        %2232 = vmatpush1.msra.mxu0 0.0
        %2233 = vmatprep.subr.mxu0 0.0
        %2234 = vmatpush1.msra.mxu0 0.0
        %2235 = vmatprep.subr.mxu0 0.0
        %2236 = vmatpush1.msra.mxu0 0.0
        %2237 = vmatprep.subr.mxu0 0.0
        %2238 = vmatpush1.msra.mxu0 0.0
        %2239 = vmatprep.subr.mxu0 0.0
        %2240 = vmatpush1.msra.mxu0 0.0
        %2241 = vmatprep.subr.mxu0 0.0
        %2242 = vmatpush1.msra.mxu0 0.0
        %2243 = vmatprep.subr.mxu0 0.0
        %2244 = vmatpush1.msra.mxu0 0.0
        %2245 = vmatprep.subr.mxu0 0.0
        %2246 = vmatpush1.msra.mxu0 0.0
        %2247 = vmatprep.subr.mxu0 0.0
        %2248 = vmatpush1.msra.mxu0 0.0
        %2249 = vmatprep.subr.mxu0 0.0
        %2250 = vmatpush1.msra.mxu0 0.0
        %2251 = vmatprep.subr.mxu0 0.0
        %2252 = vmatpush1.msra.mxu0 0.0
        %2253 = vmatprep.subr.mxu0 0.0
        %2254 = vmatpush1.msra.mxu0 0.0
        %2255 = vmatprep.subr.mxu0 0.0
        %2256 = vmatpush1.msra.mxu0 0.0
        %2257 = vmatprep.subr.mxu0 0.0
        %2258 = vmatpush1.msra.mxu0 0.0
        %2259 = vmatprep.subr.mxu0 0.0
        %2260 = vmatpush1.msra.mxu0 0.0
        %2261 = vmatprep.subr.mxu0 0.0
        %2262 = vmatpush1.msra.mxu0 0.0
        %2263 = vmatprep.subr.mxu0 0.0
        %2264 = vmatpush1.msra.mxu0 0.0
        %2265 = vmatprep.subr.mxu0 0.0
        %2266 = vmatpush1.msra.mxu0 0.0
        %2267 = vmatprep.subr.mxu0 0.0
        %2268 = vmatpush1.msra.mxu0 0.0
        %2269 = vmatprep.subr.mxu0 0.0
        %2270 = vmatpush1.msra.mxu0 0.0
        %2271 = vmatprep.subr.mxu0 0.0
        %2272 = vmatpush1.msra.mxu0 0.0
        %2273 = vmatprep.subr.mxu0 0.0
        %2274 = vmatpush1.msra.mxu0 0.0
        %2275 = vmatprep.mubr.f32.mxu0 0.0
        %v2276 = vand.u32 %v2055, 4294901760
        %v2277 = vsub.f32 %v2055, %v2276
        %2278 = vmatmul.mubr.f32.gmra.mrb[0].mxu0 %v2277
        %v2279 = vpop.f32.mrb[0].mxu0
        %v2280 = vadd.f32 %v2206, %v2279
        %v2281 = vpop.f32.mrb[0].mxu0
        %2282 = vdwg.mxu0
        %2283 = vmatprep.subr.mxu0 0.0
        %v2284 = vand.u32 %v1606, 4294901760
        %2285 = vmatpush1.msra.mxu0 %v2284
        %2286 = vmatprep.subr.mxu0 0.0
        %2287 = vmatpush1.msra.mxu0 0.0
        %2288 = vmatprep.subr.mxu0 0.0
        %2289 = vmatpush1.msra.mxu0 0.0
        %2290 = vmatprep.subr.mxu0 0.0
        %2291 = vmatpush1.msra.mxu0 0.0
        %2292 = vmatprep.subr.mxu0 0.0
        %2293 = vmatpush1.msra.mxu0 0.0
        %2294 = vmatprep.subr.mxu0 0.0
        %2295 = vmatpush1.msra.mxu0 0.0
        %2296 = vmatprep.subr.mxu0 0.0
        %2297 = vmatpush1.msra.mxu0 0.0
        %2298 = vmatprep.subr.mxu0 0.0
        %2299 = vmatpush1.msra.mxu0 0.0
        %2300 = vmatprep.subr.mxu0 0.0
        %2301 = vmatpush1.msra.mxu0 0.0
        %2302 = vmatprep.subr.mxu0 0.0
        %2303 = vmatpush1.msra.mxu0 0.0
        %2304 = vmatprep.subr.mxu0 0.0
        %2305 = vmatpush1.msra.mxu0 0.0
        %2306 = vmatprep.subr.mxu0 0.0
        %2307 = vmatpush1.msra.mxu0 0.0
        %2308 = vmatprep.subr.mxu0 0.0
        %2309 = vmatpush1.msra.mxu0 0.0
        %2310 = vmatprep.subr.mxu0 0.0
        %2311 = vmatpush1.msra.mxu0 0.0
        %2312 = vmatprep.subr.mxu0 0.0
        %2313 = vmatpush1.msra.mxu0 0.0
        %2314 = vmatprep.subr.mxu0 0.0
        %2315 = vmatpush1.msra.mxu0 0.0
        %2316 = vmatprep.subr.mxu0 0.0
        %2317 = vmatpush1.msra.mxu0 0.0
        %2318 = vmatprep.subr.mxu0 0.0
        %2319 = vmatpush1.msra.mxu0 0.0
        %2320 = vmatprep.subr.mxu0 0.0
        %2321 = vmatpush1.msra.mxu0 0.0
        %2322 = vmatprep.subr.mxu0 0.0
        %2323 = vmatpush1.msra.mxu0 0.0
        %2324 = vmatprep.subr.mxu0 0.0
        %2325 = vmatpush1.msra.mxu0 0.0
        %2326 = vmatprep.subr.mxu0 0.0
        %2327 = vmatpush1.msra.mxu0 0.0
        %2328 = vmatprep.subr.mxu0 0.0
        %2329 = vmatpush1.msra.mxu0 0.0
        %2330 = vmatprep.subr.mxu0 0.0
        %2331 = vmatpush1.msra.mxu0 0.0
        %2332 = vmatprep.subr.mxu0 0.0
        %2333 = vmatpush1.msra.mxu0 0.0
        %2334 = vmatprep.subr.mxu0 0.0
        %2335 = vmatpush1.msra.mxu0 0.0
        %2336 = vmatprep.subr.mxu0 0.0
        %2337 = vmatpush1.msra.mxu0 0.0
        %2338 = vmatprep.subr.mxu0 0.0
        %2339 = vmatpush1.msra.mxu0 0.0
        %2340 = vmatprep.subr.mxu0 0.0
        %2341 = vmatpush1.msra.mxu0 0.0
        %2342 = vmatprep.subr.mxu0 0.0
        %2343 = vmatpush1.msra.mxu0 0.0
        %2344 = vmatprep.subr.mxu0 0.0
        %2345 = vmatpush1.msra.mxu0 0.0
        %2346 = vmatprep.subr.mxu0 0.0
        %2347 = vmatpush1.msra.mxu0 0.0
        %2348 = vmatprep.mubr.f32.mxu0 0.0
        %v2349 = vand.u32 %v2055, 4294901760
        %v2350 = vsub.f32 %v2055, %v2349
        %v2351 = vand.u32 %v2350, 4294901760
        %2352 = vmatmul.mubr.f32.gmra.mrb[0].mxu0 %v2351
        %v2353 = vpop.f32.mrb[0].mxu0
        %v2354 = vadd.f32 %v2280, %v2353
        %v2355 = vpop.f32.mrb[0].mxu0
        %2356 = vdwg.mxu0
        %2357 = vmatprep.subr.mxu0 0.0
        %v2358 = vand.u32 %v1606, 4294901760
        %v2359 = vsub.f32 %v1606, %v2358
        %v2360 = vand.u32 %v2359, 4294901760
        %2361 = vmatpush1.msra.mxu0 %v2360
        %2362 = vmatprep.subr.mxu0 0.0
        %2363 = vmatpush1.msra.mxu0 0.0
        %2364 = vmatprep.subr.mxu0 0.0
        %2365 = vmatpush1.msra.mxu0 0.0
        %2366 = vmatprep.subr.mxu0 0.0
        %2367 = vmatpush1.msra.mxu0 0.0
        %2368 = vmatprep.subr.mxu0 0.0
        %2369 = vmatpush1.msra.mxu0 0.0
        %2370 = vmatprep.subr.mxu0 0.0
        %2371 = vmatpush1.msra.mxu0 0.0
        %2372 = vmatprep.subr.mxu0 0.0
        %2373 = vmatpush1.msra.mxu0 0.0
        %2374 = vmatprep.subr.mxu0 0.0
        %2375 = vmatpush1.msra.mxu0 0.0
        %2376 = vmatprep.subr.mxu0 0.0
        %2377 = vmatpush1.msra.mxu0 0.0
        %2378 = vmatprep.subr.mxu0 0.0
        %2379 = vmatpush1.msra.mxu0 0.0
        %2380 = vmatprep.subr.mxu0 0.0
        %2381 = vmatpush1.msra.mxu0 0.0
        %2382 = vmatprep.subr.mxu0 0.0
        %2383 = vmatpush1.msra.mxu0 0.0
        %2384 = vmatprep.subr.mxu0 0.0
        %2385 = vmatpush1.msra.mxu0 0.0
        %2386 = vmatprep.subr.mxu0 0.0
        %2387 = vmatpush1.msra.mxu0 0.0
        %2388 = vmatprep.subr.mxu0 0.0
        %2389 = vmatpush1.msra.mxu0 0.0
        %2390 = vmatprep.subr.mxu0 0.0
        %2391 = vmatpush1.msra.mxu0 0.0
        %2392 = vmatprep.subr.mxu0 0.0
        %2393 = vmatpush1.msra.mxu0 0.0
        %2394 = vmatprep.subr.mxu0 0.0
        %2395 = vmatpush1.msra.mxu0 0.0
        %2396 = vmatprep.subr.mxu0 0.0
        %2397 = vmatpush1.msra.mxu0 0.0
        %2398 = vmatprep.subr.mxu0 0.0
        %2399 = vmatpush1.msra.mxu0 0.0
        %2400 = vmatprep.subr.mxu0 0.0
        %2401 = vmatpush1.msra.mxu0 0.0
        %2402 = vmatprep.subr.mxu0 0.0
        %2403 = vmatpush1.msra.mxu0 0.0
        %2404 = vmatprep.subr.mxu0 0.0
        %2405 = vmatpush1.msra.mxu0 0.0
        %2406 = vmatprep.subr.mxu0 0.0
        %2407 = vmatpush1.msra.mxu0 0.0
        %2408 = vmatprep.subr.mxu0 0.0
        %2409 = vmatpush1.msra.mxu0 0.0
        %2410 = vmatprep.subr.mxu0 0.0
        %2411 = vmatpush1.msra.mxu0 0.0
        %2412 = vmatprep.subr.mxu0 0.0
        %2413 = vmatpush1.msra.mxu0 0.0
        %2414 = vmatprep.subr.mxu0 0.0
        %2415 = vmatpush1.msra.mxu0 0.0
        %2416 = vmatprep.subr.mxu0 0.0
        %2417 = vmatpush1.msra.mxu0 0.0
        %2418 = vmatprep.subr.mxu0 0.0
        %2419 = vmatpush1.msra.mxu0 0.0
        %2420 = vmatprep.subr.mxu0 0.0
        %2421 = vmatpush1.msra.mxu0 0.0
        %2422 = vmatprep.subr.mxu0 0.0
        %2423 = vmatpush1.msra.mxu0 0.0
        %2424 = vmatprep.mubr.f32.mxu0 0.0
        %v2425 = vand.u32 %v2055, 4294901760
        %2426 = vmatmul.mubr.f32.gmra.mrb[0].mxu0 %v2425
        %v2427 = vpop.f32.mrb[0].mxu0
        %v2428 = vadd.f32 %v2354, %v2427
        %v2429 = vpop.f32.mrb[0].mxu0
        %2430 = vdwg.mxu0
        %2431 = vmatprep.subr.mxu0 0.0
        %v2432 = vand.u32 %v1606, 4294901760
        %2433 = vmatpush1.msra.mxu0 %v2432
        %2434 = vmatprep.subr.mxu0 0.0
        %2435 = vmatpush1.msra.mxu0 0.0
        %2436 = vmatprep.subr.mxu0 0.0
        %2437 = vmatpush1.msra.mxu0 0.0
        %2438 = vmatprep.subr.mxu0 0.0
        %2439 = vmatpush1.msra.mxu0 0.0
        %2440 = vmatprep.subr.mxu0 0.0
        %2441 = vmatpush1.msra.mxu0 0.0
        %2442 = vmatprep.subr.mxu0 0.0
        %2443 = vmatpush1.msra.mxu0 0.0
        %2444 = vmatprep.subr.mxu0 0.0
        %2445 = vmatpush1.msra.mxu0 0.0
        %2446 = vmatprep.subr.mxu0 0.0
        %2447 = vmatpush1.msra.mxu0 0.0
        %2448 = vmatprep.subr.mxu0 0.0
        %2449 = vmatpush1.msra.mxu0 0.0
        %2450 = vmatprep.subr.mxu0 0.0
        %2451 = vmatpush1.msra.mxu0 0.0
        %2452 = vmatprep.subr.mxu0 0.0
        %2453 = vmatpush1.msra.mxu0 0.0
        %2454 = vmatprep.subr.mxu0 0.0
        %2455 = vmatpush1.msra.mxu0 0.0
        %2456 = vmatprep.subr.mxu0 0.0
        %2457 = vmatpush1.msra.mxu0 0.0
        %2458 = vmatprep.subr.mxu0 0.0
        %2459 = vmatpush1.msra.mxu0 0.0
        %2460 = vmatprep.subr.mxu0 0.0
        %2461 = vmatpush1.msra.mxu0 0.0
        %2462 = vmatprep.subr.mxu0 0.0
        %2463 = vmatpush1.msra.mxu0 0.0
        %2464 = vmatprep.subr.mxu0 0.0
        %2465 = vmatpush1.msra.mxu0 0.0
        %2466 = vmatprep.subr.mxu0 0.0
        %2467 = vmatpush1.msra.mxu0 0.0
        %2468 = vmatprep.subr.mxu0 0.0
        %2469 = vmatpush1.msra.mxu0 0.0
        %2470 = vmatprep.subr.mxu0 0.0
        %2471 = vmatpush1.msra.mxu0 0.0
        %2472 = vmatprep.subr.mxu0 0.0
        %2473 = vmatpush1.msra.mxu0 0.0
        %2474 = vmatprep.subr.mxu0 0.0
        %2475 = vmatpush1.msra.mxu0 0.0
        %2476 = vmatprep.subr.mxu0 0.0
        %2477 = vmatpush1.msra.mxu0 0.0
        %2478 = vmatprep.subr.mxu0 0.0
        %2479 = vmatpush1.msra.mxu0 0.0
        %2480 = vmatprep.subr.mxu0 0.0
        %2481 = vmatpush1.msra.mxu0 0.0
        %2482 = vmatprep.subr.mxu0 0.0
        %2483 = vmatpush1.msra.mxu0 0.0
        %2484 = vmatprep.subr.mxu0 0.0
        %2485 = vmatpush1.msra.mxu0 0.0
        %2486 = vmatprep.subr.mxu0 0.0
        %2487 = vmatpush1.msra.mxu0 0.0
        %2488 = vmatprep.subr.mxu0 0.0
        %2489 = vmatpush1.msra.mxu0 0.0
        %2490 = vmatprep.subr.mxu0 0.0
        %2491 = vmatpush1.msra.mxu0 0.0
        %2492 = vmatprep.subr.mxu0 0.0
        %2493 = vmatpush1.msra.mxu0 0.0
        %2494 = vmatprep.subr.mxu0 0.0
        %2495 = vmatpush1.msra.mxu0 0.0
        %2496 = vmatprep.mubr.f32.mxu0 0.0
        %v2497 = vand.u32 %v2055, 4294901760
        %2498 = vmatmul.mubr.f32.gmra.mrb[0].mxu0 %v2497
        %v2499 = vpop.f32.mrb[0].mxu0
        %v2500 = vadd.f32 %v2428, %v2499
        %v2501 = vpop.f32.mrb[0].mxu0
        %2502 = vdwg.mxu0
        %v2503 = vld [vmem:[#allocation5] sm:$0x3]
        %v2504 = vmul.f32 %v2500, %v2503
        %v2505 = vmul.f32 %v2051, %v2504
        %v2507 = vrot.slane %v2505, 7
        %v2509 = vsub.f32 %v2503, %v2507
        %v2510 = vlaneseq
        %v2511 = vshrl.u32 %v2510, 7
        %v2512 = vsub.s32 0, %v2511
        %v2513 = vrot.slane %v2504, %v2512
        %v2514 = vmul.f32 %v277, %v2513
        %v2515 = vlaneseq
        %v2516 = vshrl.u32 %v2515, 7
        %v2517 = vsub.s32 1, %v2516
        %v2518 = vrot.slane %v2509, %v2517
        %v2519 = vadd.f32 %v2514, %v2518
        %2520 = vst [vmem:[%s276] sm:$0x3] %v2519
        %s2521 = sand.u32 %s141, 1
        %s2522 = scalar_lea.sflag [#allocation4], %s2521
        %s2523 = sand.u32 %s141, 1
        %s2524 = smul.addr %s2523, 2
        %s2525 = scalar_lea.vmem [#allocation10], %s2524
        // Predicated region
        $region53: #{tpu_custom_call.1} parent=35 // pred_check
          %p2526 = pneg %p151
        $region54: #{tpu_custom_call.1} parent=35 // pred_check_branch
          %2528 = sbr.rel (%p2526) target = $region56
        $region55: #{tpu_custom_call.1} parent=35 // pred_region
          %s2530 = ssub.s32 32, 32
          %2531 = vsyncadd %s2522, %s2530
          %s2532 = sadd.s32 %s28, %s27
          %s2533 = smul.addr %s2532, 32
          %s2534 = scalar_lea.hbm %s4, %s2533
          %s2536 = sshll.u32 %s2525, 4
          %s2537 = int_to_ptr.vmem [resolvable:$true] %s2536
          %2539 = dma.vmem_to_hbm [thread:$0]  %s2537, 32, %s2534, %s2522
        $region56: #{tpu_custom_call.1} parent=35 // pred_fallthru
          _
      $region36: #{tpu_custom_call.1} parent=5 // pred_fallthru
        _
      %p2540 = scmp.le.s32.totalorder 2, %s18
      // Predicated region
      $region57: #{tpu_custom_call.1} parent=5 // pred_check
        %p2541 = pneg %p2540
      $region58: #{tpu_custom_call.1} parent=5 // pred_check_branch
        %2543 = sbr.rel (%p2541) target = $region60
      $region59: #{tpu_custom_call.1} parent=5 // pred_region
        %s2544 = ssub.s32 %s18, 2
        // Predicated region
        $region61: #{tpu_custom_call.1} parent=59 // pred_check
          %p2545 = pneg %p157
        $region62: #{tpu_custom_call.1} parent=59 // pred_check_branch
          %2547 = sbr.rel (%p2545) target = $region64
        $region63: #{tpu_custom_call.1} parent=59 // pred_region
          %s2548 = sand.u32 %s142, 1
          %s2549 = scalar_lea.sflag [#allocation4], %s2548
          %s2550 = sand.u32 %s142, 1
          %s2551 = smul.addr %s2550, 2
          %s2552 = scalar_lea.vmem [#allocation10], %s2551
          %2553 = dma.done %s2549, 32
        $region64: #{tpu_custom_call.1} parent=59 // pred_fallthru
          _
      $region60: #{tpu_custom_call.1} parent=5 // pred_fallthru
        _
    $region6: #{tpu_custom_call.1} parent=1 // loop_footer
      %s22 = sadd.s32 1, %s18
    $region7: #{tpu_custom_call.1} parent=1 // loop_footer_branch
      %17 = sbr.rel target = $region3
    $region8: #{tpu_custom_call.1} parent=1 // loop_exit
      _
    %2554 = vsyncpa [#allocation3], 1
    %s2555 = scalar_lea.sflag [#allocation3], 1
    %2556 = vsyncpa %s2555, 1
    %2557 = vsyncpa [#allocation6], 1
    %2558 = vsyncpa [#allocation9], 1
    %2559 = vsyncpa [#allocation4], 1
    %s2560 = scalar_lea.sflag [#allocation4], 1
    %2561 = vsyncpa %s2560, 1

</llo_original>
